<compile_context>
chip_gen: v7x
topology: tpu7x:2x2x1
jax: 0.10.0
libtpu: 0.0.40
codegen_flags: <defaults>
</compile_context>

<pallas_src>
import math

import jax
import jax.numpy as jnp
from jax.experimental import pallas as pl
from jax.experimental.pallas import tpu as pltpu


def _round_up(x, m):
    return ((x + m - 1) // m) * m


def _sublane_multiple(dtype):
    itemsize = jnp.dtype(dtype).itemsize
    return {4: 8, 2: 16, 1: 32}.get(itemsize, 8)


def _linear_kernel(x_ref, w_ref, b_ref, o_ref):
    # x_ref: (TM, D)       feature tile (pipelined over the batch grid axis)
    # w_ref: (D, C_pad)    pre-transposed, lane-dense weight; whole-array VMEM resident
    # b_ref: (1, C_pad)    f32 bias; whole-array VMEM resident
    # o_ref: (TM, C_pad)   lane-dense output tile (unmasked full-width stores)
    acc = jnp.dot(x_ref[...], w_ref[...], preferred_element_type=jnp.float32)
    o_ref[...] = (acc + b_ref[...]).astype(o_ref.dtype)


def prepare_linear_params(weight, bias, *, param_dtype=None):
    """One-time (model-load-time) parameter staging.

    weight: [C, D]  PyTorch nn.Linear layout
    bias:   [C]
    Returns (w_t, b_pad): w_t is [D, C_pad] (lane-dense, canonical MXU RHS),
    b_pad is [1, C_pad] float32.
    """
    C, D = weight.shape
    C_pad = _round_up(max(C, 128), 128)
    w = jnp.asarray(weight)
    if param_dtype is not None:
        w = w.astype(param_dtype)
    w_t = jnp.pad(w.T, ((0, 0), (0, C_pad - C)))                     # [D, C_pad]
    b_pad = jnp.pad(jnp.asarray(bias, jnp.float32), (0, C_pad - C))  # bias stays f32
    return w_t, b_pad.reshape(1, C_pad)


def linear_classifier(features, w_t, b_pad, num_classes, *, block_b=512):
    """out = features @ W.T + b, with pre-staged params from prepare_linear_params.

    features: [B, D]       (f32 or bf16 -- used as-is, no wrapper cast)
    w_t:      [D, C_pad]   pre-transposed, 128-padded weight
    b_pad:    [1, C_pad]   f32 bias
    Returns [B, num_classes] in features.dtype.
    """
    B, D = features.shape
    D_w, C_pad = w_t.shape
    assert D == D_w, "feature dim mismatch between features and prepared weight"
    out_dtype = features.dtype

    # Small-problem fast path: a standalone pallas_call is pure fixed overhead
    # here -- let XLA fuse it (ideally into the feature producer).
    if B * D <= (1 << 18) or B < 16:
        out = jnp.dot(features, w_t[:, :num_classes],
                      preferred_element_type=jnp.float32) + b_pad[0, :num_classes]
        return out.astype(out_dtype)

    # Batch tile: sublane-aligned for the operand dtype, capped at block_b.
    sub = _sublane_multiple(features.dtype)
    TM = min(int(block_b), B)
    if TM >= B and B > sub:
        # Grid would be a single step: split in two so dimension_semantics
        # ("parallel",) can shard across both TensorCores on v7x.
        TM = pl.cdiv(B, 2)
    TM = _round_up(max(TM, 1), sub)
    grid_b = pl.cdiv(B, TM)   # ragged last tile handled by Pallas (no jnp.pad of x)

    # Only raise the scoped-VMEM limit if the chosen tile needs it
    # (default TM=512 f32 is ~6.5 MiB: safe under v5e's 16 MiB default).
    vmem_need = (2 * TM * D * jnp.dtype(features.dtype).itemsize      # dbl-buffered x
                 + D_w * C_pad * jnp.dtype(w_t.dtype).itemsize        # resident weight
                 + b_pad.size * 4                                     # resident bias
                 + 2 * TM * C_pad * jnp.dtype(out_dtype).itemsize)    # dbl-buffered out
    vmem_limit = None
    if vmem_need > (14 << 20):
        vmem_limit = int(min(vmem_need * 3 // 2, 48 << 20))

    out = pl.pallas_call(
        _linear_kernel,
        out_shape=jax.ShapeDtypeStruct((B, C_pad), out_dtype),
        grid_spec=pltpu.PrefetchScalarGridSpec(
            num_scalar_prefetch=0,
            grid=(grid_b,),
            in_specs=[
                # feature tiles: pipelined (double-buffered) over the batch axis
                pl.BlockSpec((TM, D), lambda i: (i, 0)),
                # weight / bias: whole-array VMEM residents (single copy, no re-DMA)
                pl.BlockSpec(memory_space=pltpu.MemorySpace.VMEM),
                pl.BlockSpec(memory_space=pltpu.MemorySpace.VMEM),
            ],
            out_specs=pl.BlockSpec((TM, C_pad), lambda i: (i, 0)),
        ),
        compiler_params=pltpu.CompilerParams(
            # batch tiles are independent -> shard across TensorCores on v7x
            dimension_semantics=("parallel",),
            vmem_limit_bytes=vmem_limit,
        ),
    )(features, w_t, b_pad)

    return out[:, :num_classes]


def init_linear_params(key, in_features, out_features):
    """Deterministic init mimicking torch.nn.Linear's default (uniform +/- 1/sqrt(in))."""
    kw, kb = jax.random.split(key)
    bound = 1.0 / math.sqrt(in_features)
    weight = jax.random.uniform(
        kw, (out_features, in_features), jnp.float32, -bound, bound
    )
    bias = jax.random.uniform(kb, (out_features,), jnp.float32, -bound, bound)
    return weight, bias


if __name__ == "__main__":
    # efficientnet_b0 -> feat_dim = 1280, num_classes = 2 (module defaults)
    FEAT_DIM = 1280
    NUM_CLASSES = 2

    key = jax.random.PRNGKey(0)
    k_small, k_big, k_params = jax.random.split(key, 3)

    weight, bias = init_linear_params(k_params, FEAT_DIM, NUM_CLASSES)

    # --- one-time param staging (done at model-load time in real use) ---
    w_t, b_pad = prepare_linear_params(weight, bias)

    # (1) module-default tiny shape: routed to the plain-JAX fast path.
    feats_small = jax.random.normal(k_small, (8, FEAT_DIM), jnp.float32)
    out_small = jax.block_until_ready(
        linear_classifier(feats_small, w_t, b_pad, NUM_CLASSES))
    ref_small = feats_small @ weight.T + bias
    assert out_small.shape == (8, NUM_CLASSES)
    assert jnp.allclose(out_small, ref_small, atol=1e-4, rtol=1e-4)

    # (2) larger, ragged batch: exercises the Pallas kernel
    #     (2 parallel grid steps, partial last tile, no wrapper padding).
    B = 300
    feats = jax.random.normal(k_big, (B, FEAT_DIM), jnp.float32)
    out = jax.block_until_ready(linear_classifier(feats, w_t, b_pad, NUM_CLASSES))
    ref = feats @ weight.T + bias
    assert out.shape == (B, NUM_CLASSES)
    assert jnp.allclose(out, ref, atol=1e-4, rtol=1e-4)

    # (3) bf16 features arriving from upstream (no wrapper cast inside the
    #     classifier); bf16 weights staged once, bias add stays f32.
    w_t16, b_pad16 = prepare_linear_params(weight, bias, param_dtype=jnp.bfloat16)
    feats16 = feats.astype(jnp.bfloat16)   # simulates an upstream bf16 producer
    out16 = jax.block_until_ready(linear_classifier(feats16, w_t16, b_pad16, NUM_CLASSES))
    assert out16.shape == (B, NUM_CLASSES)
    assert jnp.allclose(out16.astype(jnp.float32), ref, atol=5e-2, rtol=5e-2)

    print("KERNEL_OK")
</pallas_src>

<mosaic_0001>
module attributes {stable_mosaic.version = 11 : i64} {
  func.func @_linear_kernel(%arg0: i32, %arg1: memref<152x1280xf32, #tpu.memory_space<vmem>>, %arg2: memref<1280x128xf32, #tpu.memory_space<vmem>>, %arg3: memref<1x128xf32, #tpu.memory_space<vmem>>, %arg4: memref<152x128xf32, #tpu.memory_space<vmem>>) attributes {dimension_semantics = [#tpu.dimension_semantics<parallel>], iteration_bounds = array<i64: 2>, scalar_prefetch = 0 : i64, scratch_operands = 0 : i64, tpu.core_type = #tpu.core_type<tc>, window_params = [{transform_indices = @transform_0, window_bounds = array<i64: 152, 1280>}, {pipeline_mode = #tpu.pipeline_mode<synchronous>, transform_indices = @transform_1, window_bounds = array<i64: 1280, 128>}, {pipeline_mode = #tpu.pipeline_mode<synchronous>, transform_indices = @transform_2, window_bounds = array<i64: 1, 128>}, {transform_indices = @transform_3, window_bounds = array<i64: 152, 128>}]} {
    %c0 = arith.constant 0 : index
    %c0_0 = arith.constant 0 : index
    %0 = vector.load %arg1[%c0, %c0_0] : memref<152x1280xf32, #tpu.memory_space<vmem>>, vector<152x1280xf32>
    %c0_1 = arith.constant 0 : index
    %c0_2 = arith.constant 0 : index
    %1 = vector.load %arg2[%c0_1, %c0_2] : memref<1280x128xf32, #tpu.memory_space<vmem>>, vector<1280x128xf32>
    %cst = arith.constant dense<0.000000e+00> : vector<152x128xf32>
    %2 = tpu.matmul %0, %1, %cst {dimension_numbers = #tpu.dot_dimension_numbers<[1], [0], [0], [1], [0, 0, 1, 1], [], []>} : vector<152x1280xf32>, vector<1280x128xf32>, vector<152x128xf32> -> vector<152x128xf32>
    %c0_3 = arith.constant 0 : index
    %c0_4 = arith.constant 0 : index
    %3 = vector.load %arg3[%c0_3, %c0_4] : memref<1x128xf32, #tpu.memory_space<vmem>>, vector<1x128xf32>
    %4 = vector.broadcast %3 : vector<1x128xf32> to vector<152x128xf32>
    %5 = arith.addf %2, %4 : vector<152x128xf32>
    %c0_5 = arith.constant 0 : index
    %c0_6 = arith.constant 0 : index
    %6 = vector.load %arg4[%c0_5, %c0_6] : memref<152x128xf32, #tpu.memory_space<vmem>>, vector<152x128xf32>
    tpu.vector_store %arg4[%c0_5, %c0_6], %5 {strides = array<i32>} : memref<152x128xf32, #tpu.memory_space<vmem>>, vector<152x128xf32>,
    return
  }
  func.func @transform_0(%arg0: i32) -> (i32, i32) {
    %c0_i32 = arith.constant 0 : i32
    %c0_i32_0 = arith.constant 0 : i32
    return %arg0, %c0_i32 : i32, i32
  }
  func.func @transform_1(%arg0: i32) -> (i32, i32) {
    %c0_i32 = arith.constant 0 : i32
    %c0_i32_0 = arith.constant 0 : i32
    %c0_i32_1 = arith.constant 0 : i32
    return %c0_i32, %c0_i32_0 : i32, i32
  }
  func.func @transform_2(%arg0: i32) -> (i32, i32) {
    %c0_i32 = arith.constant 0 : i32
    %c0_i32_0 = arith.constant 0 : i32
    %c0_i32_1 = arith.constant 0 : i32
    return %c0_i32, %c0_i32_0 : i32, i32
  }
  func.func @transform_3(%arg0: i32) -> (i32, i32) {
    %c0_i32 = arith.constant 0 : i32
    %c0_i32_0 = arith.constant 0 : i32
    return %arg0, %c0_i32 : i32, i32
  }
}

</mosaic_0001>

<llo_original>
// kernel: tpu_custom_call.1
$region0: #{tpu_custom_call.1}
  #allocation0 [shape = 'u32[]', space=smem, size = 0x4, offset = 0x4, fixed_abs, tag = 'smem constant byte address 0x4 - core index']
  #allocation1 [shape = 'u32[144,128]{1,0:T(1,128)}', space=vmem, size = 0x12000, scoped, tag = 'internal scratch']
  %s0 = inlined_call_operand.hbm [shape: f32[300,1280], index: 0, kind: input, shape index: {}]
  %s1 = inlined_call_operand.hbm [shape: f32[1280,128], index: 1, kind: input, shape index: {}]
  %s2 = inlined_call_operand.hbm [shape: f32[1,128], index: 2, kind: input, shape index: {}]
  %s3 = inlined_call_operand.hbm [shape: f32[300,128], index: 3, kind: output, shape index: {}]
  %s4 = sld [smem:[#allocation0]]
  $region57: #{tpu_custom_call.1} parent=0
    _
  %s6 = ssub.s32 1, %s4
  %s7 = scalar_select 0, %s6, %s4
  $region1: #{tpu_custom_call.1} parent=0
    #allocation2 [shape = 'u8[1556480]{0}', space=vmem, size = 0x17c000, scoped, tag = 'input window, operand 0']
    #allocation3 [shape = 's32[2]{0}', space=sflag, size = 0x8, scoped, tag = 'scoped memory for tpu_custom_call.1']
    #allocation4 [shape = 's32[2]{0}', space=sflag, size = 0x8, scoped, tag = 'scoped memory for tpu_custom_call.1']
    #allocation5 [shape = 'u8[655360]{0}', space=vmem, size = 0xa0000, scoped, tag = 'input window, operand 1, single buffered']
    #allocation6 [shape = 's32[1]{0}', space=sflag, size = 0x4, scoped, tag = 'scoped memory for tpu_custom_call.1']
    #allocation7 [shape = 'u8[512]{0}', space=vmem, size = 0x400, scoped, tag = 'input window, operand 2, single buffered']
    #allocation8 [shape = 'u8[155648]{0}', space=vmem, size = 0x26000, scoped, tag = 'output window, operand 0']
    %8 = vsyncpa [#allocation3], 0
    %s9 = scalar_lea.sflag [#allocation3], 1
    %10 = vsyncpa %s9, 0
    %11 = vsyncpa [#allocation6], 0
    %12 = vsyncpa [#allocation4], 0
    %s13 = scalar_lea.sflag [#allocation4], 1
    %14 = vsyncpa %s13, 0
    loop: start=0, step=1, limit=4
    $region2: #{tpu_custom_call.1} parent=1 // loop_pre_header
      _
    $region3: #{tpu_custom_call.1} parent=1 // loop_header
      %s16 = sphi 0, %s20
      %p17 = scmp.ge.s32.totalorder %s16, 4
      %s26 = sphi 0, %s28
      %s29 = sphi 0, %s26
      %s30 = sphi 0, %s29
      %s46 = sphi 0, %s30
      %s50 = sphi 0, %s50
      %s52 = sphi 0, %s50
      %s53 = sphi 0, %s52
      %s67 = sphi 0, %s53
      %s71 = sphi 0, %s71
      %s73 = sphi 0, %s71
      %s74 = sphi 0, %s73
      %s88 = sphi 0, %s74
      %s94 = sphi 0, %s96
      %s97 = sphi 0, %s94
      %s98 = sphi 0, %s97
      %s114 = sphi 0, %s98
    $region4: #{tpu_custom_call.1} parent=1 // loop_header_branch
      %19 = sbr.rel (%p17) target = $region8
    $region5: #{tpu_custom_call.1} parent=1 // loop_body
      %s21 = ssub.s32 %s16, 1
      %s22 = ssub.s32 %s16, 2
      %s23 = sadd.s32 %s16, 1
      %s24 = ssub.s32 %s16, %s23
      %p25 = scmp.eq.s32.totalorder %s24, 0
      %s27 = sadd.s32 %s26, 1
      %s28 = scalar_select %p25, %s26, %s27
      %p31 = pneg %p25
      %p32 = scmp.eq.s32.totalorder %s16, 1
      %p33 = por %p31, %p32
      %p34 = scmp.ne.s32.totalorder %s26, %s29
      %p35 = scmp.eq.s32.totalorder %s16, 0
      %p36 = por %p34, %p35
      %p37 = scmp.ne.s32.totalorder %s26, %s29
      %p38 = scmp.eq.s32.totalorder %s21, 1
      %p39 = por %p37, %p38
      %p40 = scmp.ne.s32.totalorder %s29, %s30
      %p41 = scmp.eq.s32.totalorder %s21, 0
      %p42 = por %p40, %p41
      %p43 = scmp.ne.s32.totalorder %s29, %s30
      %p44 = scmp.eq.s32.totalorder %s22, 1
      %p45 = por %p43, %p44
      %p47 = scmp.ne.s32.totalorder %s30, %s46
      %p48 = scmp.eq.s32.totalorder %s22, 0
      %p49 = por %p47, %p48
      %s51 = sadd.s32 %s50, 1
      %p54 = scmp.eq.s32.totalorder %s16, 1
      %p55 = scmp.ne.s32.totalorder %s50, %s52
      %p56 = scmp.eq.s32.totalorder %s16, 0
      %p57 = por %p55, %p56
      %p58 = scmp.ne.s32.totalorder %s50, %s52
      %p59 = scmp.eq.s32.totalorder %s21, 1
      %p60 = por %p58, %p59
      %p61 = scmp.ne.s32.totalorder %s52, %s53
      %p62 = scmp.eq.s32.totalorder %s21, 0
      %p63 = por %p61, %p62
      %p64 = scmp.ne.s32.totalorder %s52, %s53
      %p65 = scmp.eq.s32.totalorder %s22, 1
      %p66 = por %p64, %p65
      %p68 = scmp.ne.s32.totalorder %s53, %s67
      %p69 = scmp.eq.s32.totalorder %s22, 0
      %p70 = por %p68, %p69
      %s72 = sadd.s32 %s71, 1
      %p75 = scmp.eq.s32.totalorder %s16, 1
      %p76 = scmp.ne.s32.totalorder %s71, %s73
      %p77 = scmp.eq.s32.totalorder %s16, 0
      %p78 = por %p76, %p77
      %p79 = scmp.ne.s32.totalorder %s71, %s73
      %p80 = scmp.eq.s32.totalorder %s21, 1
      %p81 = por %p79, %p80
      %p82 = scmp.ne.s32.totalorder %s73, %s74
      %p83 = scmp.eq.s32.totalorder %s21, 0
      %p84 = por %p82, %p83
      %p85 = scmp.ne.s32.totalorder %s73, %s74
      %p86 = scmp.eq.s32.totalorder %s22, 1
      %p87 = por %p85, %p86
      %p89 = scmp.ne.s32.totalorder %s74, %s88
      %p90 = scmp.eq.s32.totalorder %s22, 0
      %p91 = por %p89, %p90
      %s92 = ssub.s32 %s16, %s23
      %p93 = scmp.eq.s32.totalorder %s92, 0
      %s95 = sadd.s32 %s94, 1
      %s96 = scalar_select %p93, %s94, %s95
      %p99 = pneg %p93
      %p100 = scmp.eq.s32.totalorder %s16, 1
      %p101 = por %p99, %p100
      %p102 = scmp.ne.s32.totalorder %s94, %s97
      %p103 = scmp.eq.s32.totalorder %s16, 0
      %p104 = por %p102, %p103
      %p105 = scmp.ne.s32.totalorder %s94, %s97
      %p106 = scmp.eq.s32.totalorder %s21, 1
      %p107 = por %p105, %p106
      %p108 = scmp.ne.s32.totalorder %s97, %s98
      %p109 = scmp.eq.s32.totalorder %s21, 0
      %p110 = por %p108, %p109
      %p111 = scmp.ne.s32.totalorder %s97, %s98
      %p112 = scmp.eq.s32.totalorder %s22, 1
      %p113 = por %p111, %p112
      %p115 = scmp.ne.s32.totalorder %s98, %s114
      %p116 = scmp.eq.s32.totalorder %s22, 0
      %p117 = por %p115, %p116
      %p118 = scmp.le.s32.totalorder 1, %s16
      %p119 = scmp.lt.s32.totalorder %s16, 3
      %p120 = pnand %p118, %p119
      %p121 = pneg %p120
      // Predicated region
      $region9: #{tpu_custom_call.1} parent=5 // pred_check
        _
      $region10: #{tpu_custom_call.1} parent=5 // pred_check_branch
        %123 = sbr.rel (%p120) target = $region12
      $region11: #{tpu_custom_call.1} parent=5 // pred_region
        %s124 = ssub.s32 %s16, 1
        // Predicated region
        $region13: #{tpu_custom_call.1} parent=11 // pred_check
          %p125 = pneg %p63
        $region14: #{tpu_custom_call.1} parent=11 // pred_check_branch
          %127 = sbr.rel (%p125) target = $region16
        $region15: #{tpu_custom_call.1} parent=11 // pred_region
          %s129 = ssub.s32 20480, 20480
          %130 = vsyncadd [#allocation6], %s129
          %s131 = sshll.u32 [#allocation5], 4
          %s132 = int_to_ptr.vmem [resolvable:$true] %s131
          %137 = dma.hbm_to_vmem [thread:$0]  %s1, 20480, %s132, [#allocation6], 128, 128, 8
        $region16: #{tpu_custom_call.1} parent=11 // pred_fallthru
          _
        // Predicated region
        $region17: #{tpu_custom_call.1} parent=11 // pred_check
          %p138 = pneg %p84
        $region18: #{tpu_custom_call.1} parent=11 // pred_check_branch
          %140 = sbr.rel (%p138) target = $region20
        $region19: #{tpu_custom_call.1} parent=11 // pred_region
          %s142 = ssub.s32 16, 16
          %143 = vsyncadd [#allocation6], %s142
          %s145 = sshll.u32 [#allocation7], 4
          %s146 = int_to_ptr.vmem [resolvable:$true] %s145
          %148 = dma.hbm_to_vmem [thread:$0]  %s2, 16, %s146, [#allocation6]
        $region20: #{tpu_custom_call.1} parent=11 // pred_fallthru
          _
      $region12: #{tpu_custom_call.1} parent=5 // pred_fallthru
        _
      %p149 = scmp.lt.s32.totalorder %s16, 2
      // Predicated region
      $region21: #{tpu_custom_call.1} parent=5 // pred_check
        %p150 = pneg %p149
      $region22: #{tpu_custom_call.1} parent=5 // pred_check_branch
        %152 = sbr.rel (%p150) target = $region24
      $region23: #{tpu_custom_call.1} parent=5 // pred_region
        // Predicated region
        $region25: #{tpu_custom_call.1} parent=23 // pred_check
          %p153 = pneg %p36
        $region26: #{tpu_custom_call.1} parent=23 // pred_check_branch
          %155 = sbr.rel (%p153) target = $region28
        $region27: #{tpu_custom_call.1} parent=23 // pred_region
          %s156 = sand.u32 %s26, 1
          %s157 = scalar_lea.sflag [#allocation3], %s156
          %s158 = sand.u32 %s26, 1
          %s159 = smul.addr %s158, 1520
          %s160 = scalar_lea.vmem [#allocation2], %s159
          %s161 = smul.u32 19, %s16
          %s163 = ssub.s32 24320, 24320
          %164 = vsyncadd %s157, %s163
          %s165 = smul.addr %s161, 10
          %s166 = smul.addr %s165, 128
          %s167 = scalar_lea.hbm %s0, %s166
          %s168 = sshll.u32 %s160, 4
          %s169 = int_to_ptr.vmem [resolvable:$true] %s168
          %174 = dma.hbm_to_vmem [thread:$0]  %s167, 24320, %s169, %s157, 1280, 1280, 80
        $region28: #{tpu_custom_call.1} parent=23 // pred_fallthru
          _
      $region24: #{tpu_custom_call.1} parent=5 // pred_fallthru
        _
      %p175 = scmp.le.s32.totalorder 1, %s16
      %p176 = scmp.lt.s32.totalorder %s16, 3
      %p177 = pnand %p175, %p176
      %p178 = pneg %p177
      // Predicated region
      $region29: #{tpu_custom_call.1} parent=5 // pred_check
        _
      $region30: #{tpu_custom_call.1} parent=5 // pred_check_branch
        %180 = sbr.rel (%p177) target = $region32
      $region31: #{tpu_custom_call.1} parent=5 // pred_region
        %s181 = ssub.s32 %s16, 1
        %s182 = sand.u32 %s29, 1
        %s183 = scalar_lea.sflag [#allocation3], %s182
        %s184 = sand.u32 %s29, 1
        %s185 = smul.addr %s184, 1520
        %s186 = scalar_lea.vmem [#allocation2], %s185
        // Predicated region
        $region33: #{tpu_custom_call.1} parent=31 // pred_check
          %p187 = pneg %p42
        $region34: #{tpu_custom_call.1} parent=31 // pred_check_branch
          %189 = sbr.rel (%p187) target = $region36
        $region35: #{tpu_custom_call.1} parent=31 // pred_region
          %190 = dma.done %s183, 24320
        $region36: #{tpu_custom_call.1} parent=31 // pred_fallthru
          _
        // Predicated region
        $region37: #{tpu_custom_call.1} parent=31 // pred_check
          %p191 = pneg %p63
        $region38: #{tpu_custom_call.1} parent=31 // pred_check_branch
          %193 = sbr.rel (%p191) target = $region40
        $region39: #{tpu_custom_call.1} parent=31 // pred_region
          %194 = dma.done [#allocation6], 20480
        $region40: #{tpu_custom_call.1} parent=31 // pred_fallthru
          _
        // Predicated region
        $region41: #{tpu_custom_call.1} parent=31 // pred_check
          %p195 = pneg %p84
        $region42: #{tpu_custom_call.1} parent=31 // pred_check_branch
          %197 = sbr.rel (%p195) target = $region44
        $region43: #{tpu_custom_call.1} parent=31 // pred_region
          %198 = dma.done [#allocation6], 16
        $region44: #{tpu_custom_call.1} parent=31 // pred_fallthru
          _
        %s199 = sand.u32 %s29, 1
        %s200 = scalar_lea.sflag [#allocation3], %s199
        %s201 = sand.u32 %s29, 1
        %s202 = smul.addr %s201, 1520
        %s203 = scalar_lea.vmem [#allocation2], %s202
        %p204 = pneg %p42
        %p205 = pneg %p39
        %p206 = pneg %p63
        %p207 = pneg %p60
        %p208 = pneg %p84
        %p209 = pneg %p81
        %p210 = pneg %p110
        %p211 = pneg %p107
        %s212 = sand.u32 %s97, 1
        %s213 = scalar_lea.sflag [#allocation4], %s212
        %s214 = sand.u32 %s97, 1
        %s215 = smul.addr %s214, 152
        %s216 = scalar_lea.vmem [#allocation8], %s215
        %s217 = smul.u32 19, %s21
        %s218 = smul.u32 19, %s21
        %v219 = vld [vmem:[%s186] sm:$0xff]
        %v220 = vld [vmem:[%s186 + $0x8] sm:$0xff]
        %v221 = vld [vmem:[%s186 + $0x10] sm:$0xff]
        %v222 = vld [vmem:[%s186 + $0x18] sm:$0xff]
        %v223 = vld [vmem:[%s186 + $0x20] sm:$0xff]
        %v224 = vld [vmem:[%s186 + $0x28] sm:$0xff]
        %v225 = vld [vmem:[%s186 + $0x30] sm:$0xff]
        %v226 = vld [vmem:[%s186 + $0x38] sm:$0xff]
        %v227 = vld [vmem:[%s186 + $0x40] sm:$0xff]
        %v228 = vld [vmem:[%s186 + $0x48] sm:$0xff]
        %v229 = vld [vmem:[%s186 + $0x50] sm:$0xff]
        %v230 = vld [vmem:[%s186 + $0x58] sm:$0xff]
        %v231 = vld [vmem:[%s186 + $0x60] sm:$0xff]
        %v232 = vld [vmem:[%s186 + $0x68] sm:$0xff]
        %v233 = vld [vmem:[%s186 + $0x70] sm:$0xff]
        %v234 = vld [vmem:[%s186 + $0x78] sm:$0xff]
        %v235 = vld [vmem:[%s186 + $0x80] sm:$0xff]
        %v236 = vld [vmem:[%s186 + $0x88] sm:$0xff]
        %v237 = vld [vmem:[%s186 + $0x90] sm:$0xff]
        %v238 = vld [vmem:[%s186 + $0x98] sm:$0xff]
        %v239 = vld [vmem:[%s186 + $0xa0] sm:$0xff]
        %v240 = vld [vmem:[%s186 + $0xa8] sm:$0xff]
        %v241 = vld [vmem:[%s186 + $0xb0] sm:$0xff]
        %v242 = vld [vmem:[%s186 + $0xb8] sm:$0xff]
        %v243 = vld [vmem:[%s186 + $0xc0] sm:$0xff]
        %v244 = vld [vmem:[%s186 + $0xc8] sm:$0xff]
        %v245 = vld [vmem:[%s186 + $0xd0] sm:$0xff]
        %v246 = vld [vmem:[%s186 + $0xd8] sm:$0xff]
        %v247 = vld [vmem:[%s186 + $0xe0] sm:$0xff]
        %v248 = vld [vmem:[%s186 + $0xe8] sm:$0xff]
        %v249 = vld [vmem:[%s186 + $0xf0] sm:$0xff]
        %v250 = vld [vmem:[%s186 + $0xf8] sm:$0xff]
        %v251 = vld [vmem:[%s186 + $0x100] sm:$0xff]
        %v252 = vld [vmem:[%s186 + $0x108] sm:$0xff]
        %v253 = vld [vmem:[%s186 + $0x110] sm:$0xff]
        %v254 = vld [vmem:[%s186 + $0x118] sm:$0xff]
        %v255 = vld [vmem:[%s186 + $0x120] sm:$0xff]
        %v256 = vld [vmem:[%s186 + $0x128] sm:$0xff]
        %v257 = vld [vmem:[%s186 + $0x130] sm:$0xff]
        %v258 = vld [vmem:[%s186 + $0x138] sm:$0xff]
        %v259 = vld [vmem:[%s186 + $0x140] sm:$0xff]
        %v260 = vld [vmem:[%s186 + $0x148] sm:$0xff]
        %v261 = vld [vmem:[%s186 + $0x150] sm:$0xff]
        %v262 = vld [vmem:[%s186 + $0x158] sm:$0xff]
        %v263 = vld [vmem:[%s186 + $0x160] sm:$0xff]
        %v264 = vld [vmem:[%s186 + $0x168] sm:$0xff]
        %v265 = vld [vmem:[%s186 + $0x170] sm:$0xff]
        %v266 = vld [vmem:[%s186 + $0x178] sm:$0xff]
        %v267 = vld [vmem:[%s186 + $0x180] sm:$0xff]
        %v268 = vld [vmem:[%s186 + $0x188] sm:$0xff]
        %v269 = vld [vmem:[%s186 + $0x190] sm:$0xff]
        %v270 = vld [vmem:[%s186 + $0x198] sm:$0xff]
        %v271 = vld [vmem:[%s186 + $0x1a0] sm:$0xff]
        %v272 = vld [vmem:[%s186 + $0x1a8] sm:$0xff]
        %v273 = vld [vmem:[%s186 + $0x1b0] sm:$0xff]
        %v274 = vld [vmem:[%s186 + $0x1b8] sm:$0xff]
        %v275 = vld [vmem:[%s186 + $0x1c0] sm:$0xff]
        %v276 = vld [vmem:[%s186 + $0x1c8] sm:$0xff]
        %v277 = vld [vmem:[%s186 + $0x1d0] sm:$0xff]
        %v278 = vld [vmem:[%s186 + $0x1d8] sm:$0xff]
        %v279 = vld [vmem:[%s186 + $0x1e0] sm:$0xff]
        %v280 = vld [vmem:[%s186 + $0x1e8] sm:$0xff]
        %v281 = vld [vmem:[%s186 + $0x1f0] sm:$0xff]
        %v282 = vld [vmem:[%s186 + $0x1f8] sm:$0xff]
        %v283 = vld [vmem:[%s186 + $0x200] sm:$0xff]
        %v284 = vld [vmem:[%s186 + $0x208] sm:$0xff]
        %v285 = vld [vmem:[%s186 + $0x210] sm:$0xff]
        %v286 = vld [vmem:[%s186 + $0x218] sm:$0xff]
        %v287 = vld [vmem:[%s186 + $0x220] sm:$0xff]
        %v288 = vld [vmem:[%s186 + $0x228] sm:$0xff]
        %v289 = vld [vmem:[%s186 + $0x230] sm:$0xff]
        %v290 = vld [vmem:[%s186 + $0x238] sm:$0xff]
        %v291 = vld [vmem:[%s186 + $0x240] sm:$0xff]
        %v292 = vld [vmem:[%s186 + $0x248] sm:$0xff]
        %v293 = vld [vmem:[%s186 + $0x250] sm:$0xff]
        %v294 = vld [vmem:[%s186 + $0x258] sm:$0xff]
        %v295 = vld [vmem:[%s186 + $0x260] sm:$0xff]
        %v296 = vld [vmem:[%s186 + $0x268] sm:$0xff]
        %v297 = vld [vmem:[%s186 + $0x270] sm:$0xff]
        %v298 = vld [vmem:[%s186 + $0x278] sm:$0xff]
        %v299 = vld [vmem:[%s186 + $0x280] sm:$0xff]
        %v300 = vld [vmem:[%s186 + $0x288] sm:$0xff]
        %v301 = vld [vmem:[%s186 + $0x290] sm:$0xff]
        %v302 = vld [vmem:[%s186 + $0x298] sm:$0xff]
        %v303 = vld [vmem:[%s186 + $0x2a0] sm:$0xff]
        %v304 = vld [vmem:[%s186 + $0x2a8] sm:$0xff]
        %v305 = vld [vmem:[%s186 + $0x2b0] sm:$0xff]
        %v306 = vld [vmem:[%s186 + $0x2b8] sm:$0xff]
        %v307 = vld [vmem:[%s186 + $0x2c0] sm:$0xff]
        %v308 = vld [vmem:[%s186 + $0x2c8] sm:$0xff]
        %v309 = vld [vmem:[%s186 + $0x2d0] sm:$0xff]
        %v310 = vld [vmem:[%s186 + $0x2d8] sm:$0xff]
        %v311 = vld [vmem:[%s186 + $0x2e0] sm:$0xff]
        %v312 = vld [vmem:[%s186 + $0x2e8] sm:$0xff]
        %v313 = vld [vmem:[%s186 + $0x2f0] sm:$0xff]
        %v314 = vld [vmem:[%s186 + $0x2f8] sm:$0xff]
        %v315 = vld [vmem:[%s186 + $0x300] sm:$0xff]
        %v316 = vld [vmem:[%s186 + $0x308] sm:$0xff]
        %v317 = vld [vmem:[%s186 + $0x310] sm:$0xff]
        %v318 = vld [vmem:[%s186 + $0x318] sm:$0xff]
        %v319 = vld [vmem:[%s186 + $0x320] sm:$0xff]
        %v320 = vld [vmem:[%s186 + $0x328] sm:$0xff]
        %v321 = vld [vmem:[%s186 + $0x330] sm:$0xff]
        %v322 = vld [vmem:[%s186 + $0x338] sm:$0xff]
        %v323 = vld [vmem:[%s186 + $0x340] sm:$0xff]
        %v324 = vld [vmem:[%s186 + $0x348] sm:$0xff]
        %v325 = vld [vmem:[%s186 + $0x350] sm:$0xff]
        %v326 = vld [vmem:[%s186 + $0x358] sm:$0xff]
        %v327 = vld [vmem:[%s186 + $0x360] sm:$0xff]
        %v328 = vld [vmem:[%s186 + $0x368] sm:$0xff]
        %v329 = vld [vmem:[%s186 + $0x370] sm:$0xff]
        %v330 = vld [vmem:[%s186 + $0x378] sm:$0xff]
        %v331 = vld [vmem:[%s186 + $0x380] sm:$0xff]
        %v332 = vld [vmem:[%s186 + $0x388] sm:$0xff]
        %v333 = vld [vmem:[%s186 + $0x390] sm:$0xff]
        %v334 = vld [vmem:[%s186 + $0x398] sm:$0xff]
        %v335 = vld [vmem:[%s186 + $0x3a0] sm:$0xff]
        %v336 = vld [vmem:[%s186 + $0x3a8] sm:$0xff]
        %v337 = vld [vmem:[%s186 + $0x3b0] sm:$0xff]
        %v338 = vld [vmem:[%s186 + $0x3b8] sm:$0xff]
        %v339 = vld [vmem:[%s186 + $0x3c0] sm:$0xff]
        %v340 = vld [vmem:[%s186 + $0x3c8] sm:$0xff]
        %v341 = vld [vmem:[%s186 + $0x3d0] sm:$0xff]
        %v342 = vld [vmem:[%s186 + $0x3d8] sm:$0xff]
        %v343 = vld [vmem:[%s186 + $0x3e0] sm:$0xff]
        %v344 = vld [vmem:[%s186 + $0x3e8] sm:$0xff]
        %v345 = vld [vmem:[%s186 + $0x3f0] sm:$0xff]
        %v346 = vld [vmem:[%s186 + $0x3f8] sm:$0xff]
        %v347 = vld [vmem:[%s186 + $0x400] sm:$0xff]
        %v348 = vld [vmem:[%s186 + $0x408] sm:$0xff]
        %v349 = vld [vmem:[%s186 + $0x410] sm:$0xff]
        %v350 = vld [vmem:[%s186 + $0x418] sm:$0xff]
        %v351 = vld [vmem:[%s186 + $0x420] sm:$0xff]
        %v352 = vld [vmem:[%s186 + $0x428] sm:$0xff]
        %v353 = vld [vmem:[%s186 + $0x430] sm:$0xff]
        %v354 = vld [vmem:[%s186 + $0x438] sm:$0xff]
        %v355 = vld [vmem:[%s186 + $0x440] sm:$0xff]
        %v356 = vld [vmem:[%s186 + $0x448] sm:$0xff]
        %v357 = vld [vmem:[%s186 + $0x450] sm:$0xff]
        %v358 = vld [vmem:[%s186 + $0x458] sm:$0xff]
        %v359 = vld [vmem:[%s186 + $0x460] sm:$0xff]
        %v360 = vld [vmem:[%s186 + $0x468] sm:$0xff]
        %v361 = vld [vmem:[%s186 + $0x470] sm:$0xff]
        %v362 = vld [vmem:[%s186 + $0x478] sm:$0xff]
        %v363 = vld [vmem:[%s186 + $0x480] sm:$0xff]
        %v364 = vld [vmem:[%s186 + $0x488] sm:$0xff]
        %v365 = vld [vmem:[%s186 + $0x490] sm:$0xff]
        %v366 = vld [vmem:[%s186 + $0x498] sm:$0xff]
        %v367 = vld [vmem:[%s186 + $0x4a0] sm:$0xff]
        %v368 = vld [vmem:[%s186 + $0x4a8] sm:$0xff]
        %v369 = vld [vmem:[%s186 + $0x4b0] sm:$0xff]
        %v370 = vld [vmem:[%s186 + $0x4b8] sm:$0xff]
        %v371 = vld [vmem:[%s186 + $0x4c0] sm:$0xff]
        %v372 = vld [vmem:[%s186 + $0x4c8] sm:$0xff]
        %v373 = vld [vmem:[%s186 + $0x4d0] sm:$0xff]
        %v374 = vld [vmem:[%s186 + $0x4d8] sm:$0xff]
        %v375 = vld [vmem:[%s186 + $0x4e0] sm:$0xff]
        %v376 = vld [vmem:[%s186 + $0x4e8] sm:$0xff]
        %v377 = vld [vmem:[%s186 + $0x4f0] sm:$0xff]
        %v378 = vld [vmem:[%s186 + $0x4f8] sm:$0xff]
        %v379 = vld [vmem:[%s186 + $0x500] sm:$0xff]
        %v380 = vld [vmem:[%s186 + $0x508] sm:$0xff]
        %v381 = vld [vmem:[%s186 + $0x510] sm:$0xff]
        %v382 = vld [vmem:[%s186 + $0x518] sm:$0xff]
        %v383 = vld [vmem:[%s186 + $0x520] sm:$0xff]
        %v384 = vld [vmem:[%s186 + $0x528] sm:$0xff]
        %v385 = vld [vmem:[%s186 + $0x530] sm:$0xff]
        %v386 = vld [vmem:[%s186 + $0x538] sm:$0xff]
        %v387 = vld [vmem:[%s186 + $0x540] sm:$0xff]
        %v388 = vld [vmem:[%s186 + $0x548] sm:$0xff]
        %v389 = vld [vmem:[%s186 + $0x550] sm:$0xff]
        %v390 = vld [vmem:[%s186 + $0x558] sm:$0xff]
        %v391 = vld [vmem:[%s186 + $0x560] sm:$0xff]
        %v392 = vld [vmem:[%s186 + $0x568] sm:$0xff]
        %v393 = vld [vmem:[%s186 + $0x570] sm:$0xff]
        %v394 = vld [vmem:[%s186 + $0x578] sm:$0xff]
        %v395 = vld [vmem:[%s186 + $0x580] sm:$0xff]
        %v396 = vld [vmem:[%s186 + $0x588] sm:$0xff]
        %v397 = vld [vmem:[%s186 + $0x590] sm:$0xff]
        %v398 = vld [vmem:[%s186 + $0x598] sm:$0xff]
        %v399 = vld [vmem:[%s186 + $0x5a0] sm:$0xff]
        %v400 = vld [vmem:[%s186 + $0x5a8] sm:$0xff]
        %v401 = vld [vmem:[%s186 + $0x5b0] sm:$0xff]
        %v402 = vld [vmem:[%s186 + $0x5b8] sm:$0xff]
        %v403 = vld [vmem:[%s186 + $0x5c0] sm:$0xff]
        %v404 = vld [vmem:[%s186 + $0x5c8] sm:$0xff]
        %v405 = vld [vmem:[%s186 + $0x5d0] sm:$0xff]
        %v406 = vld [vmem:[%s186 + $0x5d8] sm:$0xff]
        %v407 = vld [vmem:[%s186 + $0x5e0] sm:$0xff]
        %v408 = vld [vmem:[%s186 + $0x5e8] sm:$0xff]
        %v409 = vld [vmem:[#allocation5] sm:$0xff]
        %v410 = vld [vmem:[#allocation5 + $0x8] sm:$0xff]
        %v411 = vld [vmem:[#allocation5 + $0x10] sm:$0xff]
        %v412 = vld [vmem:[#allocation5 + $0x18] sm:$0xff]
        %v413 = vld [vmem:[#allocation5 + $0x20] sm:$0xff]
        %v414 = vld [vmem:[#allocation5 + $0x28] sm:$0xff]
        %v415 = vld [vmem:[#allocation5 + $0x30] sm:$0xff]
        %v416 = vld [vmem:[#allocation5 + $0x38] sm:$0xff]
        %v417 = vld [vmem:[#allocation5 + $0x40] sm:$0xff]
        %v418 = vld [vmem:[#allocation5 + $0x48] sm:$0xff]
        %v419 = vld [vmem:[#allocation5 + $0x50] sm:$0xff]
        %v420 = vld [vmem:[#allocation5 + $0x58] sm:$0xff]
        %v421 = vld [vmem:[#allocation5 + $0x60] sm:$0xff]
        %v422 = vld [vmem:[#allocation5 + $0x68] sm:$0xff]
        %v423 = vld [vmem:[#allocation5 + $0x70] sm:$0xff]
        %v424 = vld [vmem:[#allocation5 + $0x78] sm:$0xff]
        %v425 = vld [vmem:[#allocation5 + $0x80] sm:$0xff]
        %v426 = vld [vmem:[#allocation5 + $0x88] sm:$0xff]
        %v427 = vld [vmem:[#allocation5 + $0x90] sm:$0xff]
        %v428 = vld [vmem:[#allocation5 + $0x98] sm:$0xff]
        %v429 = vld [vmem:[#allocation5 + $0xa0] sm:$0xff]
        %v430 = vld [vmem:[#allocation5 + $0xa8] sm:$0xff]
        %v431 = vld [vmem:[#allocation5 + $0xb0] sm:$0xff]
        %v432 = vld [vmem:[#allocation5 + $0xb8] sm:$0xff]
        %v433 = vld [vmem:[#allocation5 + $0xc0] sm:$0xff]
        %v434 = vld [vmem:[#allocation5 + $0xc8] sm:$0xff]
        %v435 = vld [vmem:[#allocation5 + $0xd0] sm:$0xff]
        %v436 = vld [vmem:[#allocation5 + $0xd8] sm:$0xff]
        %v437 = vld [vmem:[#allocation5 + $0xe0] sm:$0xff]
        %v438 = vld [vmem:[#allocation5 + $0xe8] sm:$0xff]
        %v439 = vld [vmem:[#allocation5 + $0xf0] sm:$0xff]
        %v440 = vld [vmem:[#allocation5 + $0xf8] sm:$0xff]
        %v441 = vld [vmem:[#allocation5 + $0x100] sm:$0xff]
        %v442 = vld [vmem:[#allocation5 + $0x108] sm:$0xff]
        %v443 = vld [vmem:[#allocation5 + $0x110] sm:$0xff]
        %v444 = vld [vmem:[#allocation5 + $0x118] sm:$0xff]
        %v445 = vld [vmem:[#allocation5 + $0x120] sm:$0xff]
        %v446 = vld [vmem:[#allocation5 + $0x128] sm:$0xff]
        %v447 = vld [vmem:[#allocation5 + $0x130] sm:$0xff]
        %v448 = vld [vmem:[#allocation5 + $0x138] sm:$0xff]
        %v449 = vld [vmem:[#allocation5 + $0x140] sm:$0xff]
        %v450 = vld [vmem:[#allocation5 + $0x148] sm:$0xff]
        %v451 = vld [vmem:[#allocation5 + $0x150] sm:$0xff]
        %v452 = vld [vmem:[#allocation5 + $0x158] sm:$0xff]
        %v453 = vld [vmem:[#allocation5 + $0x160] sm:$0xff]
        %v454 = vld [vmem:[#allocation5 + $0x168] sm:$0xff]
        %v455 = vld [vmem:[#allocation5 + $0x170] sm:$0xff]
        %v456 = vld [vmem:[#allocation5 + $0x178] sm:$0xff]
        %v457 = vld [vmem:[#allocation5 + $0x180] sm:$0xff]
        %v458 = vld [vmem:[#allocation5 + $0x188] sm:$0xff]
        %v459 = vld [vmem:[#allocation5 + $0x190] sm:$0xff]
        %v460 = vld [vmem:[#allocation5 + $0x198] sm:$0xff]
        %v461 = vld [vmem:[#allocation5 + $0x1a0] sm:$0xff]
        %v462 = vld [vmem:[#allocation5 + $0x1a8] sm:$0xff]
        %v463 = vld [vmem:[#allocation5 + $0x1b0] sm:$0xff]
        %v464 = vld [vmem:[#allocation5 + $0x1b8] sm:$0xff]
        %v465 = vld [vmem:[#allocation5 + $0x1c0] sm:$0xff]
        %v466 = vld [vmem:[#allocation5 + $0x1c8] sm:$0xff]
        %v467 = vld [vmem:[#allocation5 + $0x1d0] sm:$0xff]
        %v468 = vld [vmem:[#allocation5 + $0x1d8] sm:$0xff]
        %v469 = vld [vmem:[#allocation5 + $0x1e0] sm:$0xff]
        %v470 = vld [vmem:[#allocation5 + $0x1e8] sm:$0xff]
        %v471 = vld [vmem:[#allocation5 + $0x1f0] sm:$0xff]
        %v472 = vld [vmem:[#allocation5 + $0x1f8] sm:$0xff]
        %v473 = vld [vmem:[#allocation5 + $0x200] sm:$0xff]
        %v474 = vld [vmem:[#allocation5 + $0x208] sm:$0xff]
        %v475 = vld [vmem:[#allocation5 + $0x210] sm:$0xff]
        %v476 = vld [vmem:[#allocation5 + $0x218] sm:$0xff]
        %v477 = vld [vmem:[#allocation5 + $0x220] sm:$0xff]
        %v478 = vld [vmem:[#allocation5 + $0x228] sm:$0xff]
        %v479 = vld [vmem:[#allocation5 + $0x230] sm:$0xff]
        %v480 = vld [vmem:[#allocation5 + $0x238] sm:$0xff]
        %v481 = vld [vmem:[#allocation5 + $0x240] sm:$0xff]
        %v482 = vld [vmem:[#allocation5 + $0x248] sm:$0xff]
        %v483 = vld [vmem:[#allocation5 + $0x250] sm:$0xff]
        %v484 = vld [vmem:[#allocation5 + $0x258] sm:$0xff]
        %v485 = vld [vmem:[#allocation5 + $0x260] sm:$0xff]
        %v486 = vld [vmem:[#allocation5 + $0x268] sm:$0xff]
        %v487 = vld [vmem:[#allocation5 + $0x270] sm:$0xff]
        %v488 = vld [vmem:[#allocation5 + $0x278] sm:$0xff]
        %v489 = vld [vmem:[#allocation5 + $0x280] sm:$0xff]
        %v490 = vld [vmem:[#allocation5 + $0x288] sm:$0xff]
        %v491 = vld [vmem:[#allocation5 + $0x290] sm:$0xff]
        %v492 = vld [vmem:[#allocation5 + $0x298] sm:$0xff]
        %v493 = vld [vmem:[#allocation5 + $0x2a0] sm:$0xff]
        %v494 = vld [vmem:[#allocation5 + $0x2a8] sm:$0xff]
        %v495 = vld [vmem:[#allocation5 + $0x2b0] sm:$0xff]
        %v496 = vld [vmem:[#allocation5 + $0x2b8] sm:$0xff]
        %v497 = vld [vmem:[#allocation5 + $0x2c0] sm:$0xff]
        %v498 = vld [vmem:[#allocation5 + $0x2c8] sm:$0xff]
        %v499 = vld [vmem:[#allocation5 + $0x2d0] sm:$0xff]
        %v500 = vld [vmem:[#allocation5 + $0x2d8] sm:$0xff]
        %v501 = vld [vmem:[#allocation5 + $0x2e0] sm:$0xff]
        %v502 = vld [vmem:[#allocation5 + $0x2e8] sm:$0xff]
        %v503 = vld [vmem:[#allocation5 + $0x2f0] sm:$0xff]
        %v504 = vld [vmem:[#allocation5 + $0x2f8] sm:$0xff]
        %v505 = vld [vmem:[#allocation5 + $0x300] sm:$0xff]
        %v506 = vld [vmem:[#allocation5 + $0x308] sm:$0xff]
        %v507 = vld [vmem:[#allocation5 + $0x310] sm:$0xff]
        %v508 = vld [vmem:[#allocation5 + $0x318] sm:$0xff]
        %v509 = vld [vmem:[#allocation5 + $0x320] sm:$0xff]
        %v510 = vld [vmem:[#allocation5 + $0x328] sm:$0xff]
        %v511 = vld [vmem:[#allocation5 + $0x330] sm:$0xff]
        %v512 = vld [vmem:[#allocation5 + $0x338] sm:$0xff]
        %v513 = vld [vmem:[#allocation5 + $0x340] sm:$0xff]
        %v514 = vld [vmem:[#allocation5 + $0x348] sm:$0xff]
        %v515 = vld [vmem:[#allocation5 + $0x350] sm:$0xff]
        %v516 = vld [vmem:[#allocation5 + $0x358] sm:$0xff]
        %v517 = vld [vmem:[#allocation5 + $0x360] sm:$0xff]
        %v518 = vld [vmem:[#allocation5 + $0x368] sm:$0xff]
        %v519 = vld [vmem:[#allocation5 + $0x370] sm:$0xff]
        %v520 = vld [vmem:[#allocation5 + $0x378] sm:$0xff]
        %v521 = vld [vmem:[#allocation5 + $0x380] sm:$0xff]
        %v522 = vld [vmem:[#allocation5 + $0x388] sm:$0xff]
        %v523 = vld [vmem:[#allocation5 + $0x390] sm:$0xff]
        %v524 = vld [vmem:[#allocation5 + $0x398] sm:$0xff]
        %v525 = vld [vmem:[#allocation5 + $0x3a0] sm:$0xff]
        %v526 = vld [vmem:[#allocation5 + $0x3a8] sm:$0xff]
        %v527 = vld [vmem:[#allocation5 + $0x3b0] sm:$0xff]
        %v528 = vld [vmem:[#allocation5 + $0x3b8] sm:$0xff]
        %v529 = vld [vmem:[#allocation5 + $0x3c0] sm:$0xff]
        %v530 = vld [vmem:[#allocation5 + $0x3c8] sm:$0xff]
        %v531 = vld [vmem:[#allocation5 + $0x3d0] sm:$0xff]
        %v532 = vld [vmem:[#allocation5 + $0x3d8] sm:$0xff]
        %v533 = vld [vmem:[#allocation5 + $0x3e0] sm:$0xff]
        %v534 = vld [vmem:[#allocation5 + $0x3e8] sm:$0xff]
        %v535 = vld [vmem:[#allocation5 + $0x3f0] sm:$0xff]
        %v536 = vld [vmem:[#allocation5 + $0x3f8] sm:$0xff]
        %v537 = vld [vmem:[#allocation5 + $0x400] sm:$0xff]
        %v538 = vld [vmem:[#allocation5 + $0x408] sm:$0xff]
        %v539 = vld [vmem:[#allocation5 + $0x410] sm:$0xff]
        %v540 = vld [vmem:[#allocation5 + $0x418] sm:$0xff]
        %v541 = vld [vmem:[#allocation5 + $0x420] sm:$0xff]
        %v542 = vld [vmem:[#allocation5 + $0x428] sm:$0xff]
        %v543 = vld [vmem:[#allocation5 + $0x430] sm:$0xff]
        %v544 = vld [vmem:[#allocation5 + $0x438] sm:$0xff]
        %v545 = vld [vmem:[#allocation5 + $0x440] sm:$0xff]
        %v546 = vld [vmem:[#allocation5 + $0x448] sm:$0xff]
        %v547 = vld [vmem:[#allocation5 + $0x450] sm:$0xff]
        %v548 = vld [vmem:[#allocation5 + $0x458] sm:$0xff]
        %v549 = vld [vmem:[#allocation5 + $0x460] sm:$0xff]
        %v550 = vld [vmem:[#allocation5 + $0x468] sm:$0xff]
        %v551 = vld [vmem:[#allocation5 + $0x470] sm:$0xff]
        %v552 = vld [vmem:[#allocation5 + $0x478] sm:$0xff]
        %v553 = vld [vmem:[#allocation5 + $0x480] sm:$0xff]
        %v554 = vld [vmem:[#allocation5 + $0x488] sm:$0xff]
        %v555 = vld [vmem:[#allocation5 + $0x490] sm:$0xff]
        %v556 = vld [vmem:[#allocation5 + $0x498] sm:$0xff]
        %v557 = vld [vmem:[#allocation5 + $0x4a0] sm:$0xff]
        %v558 = vld [vmem:[#allocation5 + $0x4a8] sm:$0xff]
        %v559 = vld [vmem:[#allocation5 + $0x4b0] sm:$0xff]
        %v560 = vld [vmem:[#allocation5 + $0x4b8] sm:$0xff]
        %v561 = vld [vmem:[#allocation5 + $0x4c0] sm:$0xff]
        %v562 = vld [vmem:[#allocation5 + $0x4c8] sm:$0xff]
        %v563 = vld [vmem:[#allocation5 + $0x4d0] sm:$0xff]
        %v564 = vld [vmem:[#allocation5 + $0x4d8] sm:$0xff]
        %v565 = vld [vmem:[#allocation5 + $0x4e0] sm:$0xff]
        %v566 = vld [vmem:[#allocation5 + $0x4e8] sm:$0xff]
        %v567 = vld [vmem:[#allocation5 + $0x4f0] sm:$0xff]
        %v568 = vld [vmem:[#allocation5 + $0x4f8] sm:$0xff]
        %v569 = vld [vmem:[#allocation7] sm:$0x1]
        %v571 = vlaneseq
        %v572 = vshrl.u32 %v571, 7
        %v573 = vsub.s32 0, %v572
        %v574 = vrot.slane %v569, %v573
        %576 = vmatprep.subr.mxu0 0.0
        %577 = vmatpush1.msra.mxu0 %v409
        %578 = vmatprep.subr.mxu0 0.0
        %579 = vmatpush1.msra.mxu0 %v410
        %580 = vmatprep.subr.mxu0 0.0
        %581 = vmatpush1.msra.mxu0 %v411
        %582 = vmatprep.subr.mxu0 0.0
        %583 = vmatpush1.msra.mxu0 %v412
        %584 = vmatprep.subr.mxu0 0.0
        %585 = vmatpush1.msra.mxu0 %v413
        %586 = vmatprep.subr.mxu0 0.0
        %587 = vmatpush1.msra.mxu0 %v414
        %588 = vmatprep.subr.mxu0 0.0
        %589 = vmatpush1.msra.mxu0 %v415
        %590 = vmatprep.subr.mxu0 0.0
        %591 = vmatpush1.msra.mxu0 %v416
        %592 = vmatprep.subr.mxu0 0.0
        %593 = vmatpush1.msra.mxu0 %v417
        %594 = vmatprep.subr.mxu0 0.0
        %595 = vmatpush1.msra.mxu0 %v418
        %596 = vmatprep.subr.mxu0 0.0
        %597 = vmatpush1.msra.mxu0 %v419
        %598 = vmatprep.subr.mxu0 0.0
        %599 = vmatpush1.msra.mxu0 %v420
        %600 = vmatprep.subr.mxu0 0.0
        %601 = vmatpush1.msra.mxu0 %v421
        %602 = vmatprep.subr.mxu0 0.0
        %603 = vmatpush1.msra.mxu0 %v422
        %604 = vmatprep.subr.mxu0 0.0
        %605 = vmatpush1.msra.mxu0 %v423
        %606 = vmatprep.subr.mxu0 0.0
        %607 = vmatpush1.msra.mxu0 %v424
        %608 = vmatprep.subr.mxu0 0.0
        %609 = vmatpush1.msra.mxu0 %v425
        %610 = vmatprep.subr.mxu0 0.0
        %611 = vmatpush1.msra.mxu0 %v426
        %612 = vmatprep.subr.mxu0 0.0
        %613 = vmatpush1.msra.mxu0 %v427
        %614 = vmatprep.subr.mxu0 0.0
        %615 = vmatpush1.msra.mxu0 %v428
        %616 = vmatprep.subr.mxu0 0.0
        %617 = vmatpush1.msra.mxu0 %v429
        %618 = vmatprep.subr.mxu0 0.0
        %619 = vmatpush1.msra.mxu0 %v430
        %620 = vmatprep.subr.mxu0 0.0
        %621 = vmatpush1.msra.mxu0 %v431
        %622 = vmatprep.subr.mxu0 0.0
        %623 = vmatpush1.msra.mxu0 %v432
        %624 = vmatprep.subr.mxu0 0.0
        %625 = vmatpush1.msra.mxu0 %v433
        %626 = vmatprep.subr.mxu0 0.0
        %627 = vmatpush1.msra.mxu0 %v434
        %628 = vmatprep.subr.mxu0 0.0
        %629 = vmatpush1.msra.mxu0 %v435
        %630 = vmatprep.subr.mxu0 0.0
        %631 = vmatpush1.msra.mxu0 %v436
        %632 = vmatprep.subr.mxu0 0.0
        %633 = vmatpush1.msra.mxu0 %v437
        %634 = vmatprep.subr.mxu0 0.0
        %635 = vmatpush1.msra.mxu0 %v438
        %636 = vmatprep.subr.mxu0 0.0
        %637 = vmatpush1.msra.mxu0 %v439
        %638 = vmatprep.subr.mxu0 0.0
        %639 = vmatpush1.msra.mxu0 %v440
        %640 = vmatprep.mubr.f32.mxu0 %v220
        %641 = vmatmul.mubr.f32.gmra.mrb[0].mxu0 %v219
        %v642 = vpop.f32.mrb[0].mxu0
        %v643 = vadd.f32 %v574, %v642
        %v644 = vpop.f32.mrb[0].mxu0
        %645 = vmatprep.mubr.f32.mxu0 %v230
        %646 = vmatmul.mubr.f32.gmra.mrb[0].mxu0 %v229
        %v647 = vpop.f32.mrb[0].mxu0
        %v648 = vadd.f32 %v574, %v647
        %v649 = vpop.f32.mrb[0].mxu0
        %650 = vmatprep.mubr.f32.mxu0 %v240
        %651 = vmatmul.mubr.f32.gmra.mrb[0].mxu0 %v239
        %v652 = vpop.f32.mrb[0].mxu0
        %v653 = vadd.f32 %v574, %v652
        %v654 = vpop.f32.mrb[0].mxu0
        %655 = vmatprep.mubr.f32.mxu0 %v250
        %656 = vmatmul.mubr.f32.gmra.mrb[0].mxu0 %v249
        %v657 = vpop.f32.mrb[0].mxu0
        %v658 = vadd.f32 %v574, %v657
        %v659 = vpop.f32.mrb[0].mxu0
        %660 = vmatprep.mubr.f32.mxu0 %v260
        %661 = vmatmul.mubr.f32.gmra.mrb[0].mxu0 %v259
        %v662 = vpop.f32.mrb[0].mxu0
        %v663 = vadd.f32 %v574, %v662
        %v664 = vpop.f32.mrb[0].mxu0
        %665 = vmatprep.mubr.f32.mxu0 %v270
        %666 = vmatmul.mubr.f32.gmra.mrb[0].mxu0 %v269
        %v667 = vpop.f32.mrb[0].mxu0
        %v668 = vadd.f32 %v574, %v667
        %v669 = vpop.f32.mrb[0].mxu0
        %670 = vmatprep.mubr.f32.mxu0 %v280
        %671 = vmatmul.mubr.f32.gmra.mrb[0].mxu0 %v279
        %v672 = vpop.f32.mrb[0].mxu0
        %v673 = vadd.f32 %v574, %v672
        %v674 = vpop.f32.mrb[0].mxu0
        %675 = vmatprep.mubr.f32.mxu0 %v290
        %676 = vmatmul.mubr.f32.gmra.mrb[0].mxu0 %v289
        %v677 = vpop.f32.mrb[0].mxu0
        %v678 = vadd.f32 %v574, %v677
        %v679 = vpop.f32.mrb[0].mxu0
        %680 = vmatprep.mubr.f32.mxu0 %v300
        %681 = vmatmul.mubr.f32.gmra.mrb[0].mxu0 %v299
        %v682 = vpop.f32.mrb[0].mxu0
        %v683 = vadd.f32 %v574, %v682
        %v684 = vpop.f32.mrb[0].mxu0
        %685 = vmatprep.mubr.f32.mxu0 %v310
        %686 = vmatmul.mubr.f32.gmra.mrb[0].mxu0 %v309
        %v687 = vpop.f32.mrb[0].mxu0
        %v688 = vadd.f32 %v574, %v687
        %v689 = vpop.f32.mrb[0].mxu0
        %690 = vmatprep.mubr.f32.mxu0 %v320
        %691 = vmatmul.mubr.f32.gmra.mrb[0].mxu0 %v319
        %v692 = vpop.f32.mrb[0].mxu0
        %v693 = vadd.f32 %v574, %v692
        %v694 = vpop.f32.mrb[0].mxu0
        %695 = vmatprep.mubr.f32.mxu0 %v330
        %696 = vmatmul.mubr.f32.gmra.mrb[0].mxu0 %v329
        %v697 = vpop.f32.mrb[0].mxu0
        %v698 = vadd.f32 %v574, %v697
        %v699 = vpop.f32.mrb[0].mxu0
        %700 = vmatprep.mubr.f32.mxu0 %v340
        %701 = vmatmul.mubr.f32.gmra.mrb[0].mxu0 %v339
        %v702 = vpop.f32.mrb[0].mxu0
        %v703 = vadd.f32 %v574, %v702
        %v704 = vpop.f32.mrb[0].mxu0
        %705 = vmatprep.mubr.f32.mxu0 %v350
        %706 = vmatmul.mubr.f32.gmra.mrb[0].mxu0 %v349
        %v707 = vpop.f32.mrb[0].mxu0
        %v708 = vadd.f32 %v574, %v707
        %v709 = vpop.f32.mrb[0].mxu0
        %710 = vmatprep.mubr.f32.mxu0 %v360
        %711 = vmatmul.mubr.f32.gmra.mrb[0].mxu0 %v359
        %v712 = vpop.f32.mrb[0].mxu0
        %v713 = vadd.f32 %v574, %v712
        %v714 = vpop.f32.mrb[0].mxu0
        %715 = vmatprep.mubr.f32.mxu0 %v370
        %716 = vmatmul.mubr.f32.gmra.mrb[0].mxu0 %v369
        %v717 = vpop.f32.mrb[0].mxu0
        %v718 = vadd.f32 %v574, %v717
        %v719 = vpop.f32.mrb[0].mxu0
        %720 = vmatprep.mubr.f32.mxu0 %v380
        %721 = vmatmul.mubr.f32.gmra.mrb[0].mxu0 %v379
        %v722 = vpop.f32.mrb[0].mxu0
        %v723 = vadd.f32 %v574, %v722
        %v724 = vpop.f32.mrb[0].mxu0
        %725 = vmatprep.mubr.f32.mxu0 %v390
        %726 = vmatmul.mubr.f32.gmra.mrb[0].mxu0 %v389
        %v727 = vpop.f32.mrb[0].mxu0
        %v728 = vadd.f32 %v574, %v727
        %v729 = vpop.f32.mrb[0].mxu0
        %730 = vmatprep.mubr.f32.mxu0 %v400
        %731 = vmatmul.mubr.f32.gmra.mrb[0].mxu0 %v399
        %v732 = vpop.f32.mrb[0].mxu0
        %v733 = vadd.f32 %v574, %v732
        %v734 = vpop.f32.mrb[0].mxu0
        %735 = vdwg.mxu0
        %736 = vmatprep.subr.mxu0 0.0
        %737 = vmatpush1.msra.mxu0 %v441
        %738 = vmatprep.subr.mxu0 0.0
        %739 = vmatpush1.msra.mxu0 %v442
        %740 = vmatprep.subr.mxu0 0.0
        %741 = vmatpush1.msra.mxu0 %v443
        %742 = vmatprep.subr.mxu0 0.0
        %743 = vmatpush1.msra.mxu0 %v444
        %744 = vmatprep.subr.mxu0 0.0
        %745 = vmatpush1.msra.mxu0 %v445
        %746 = vmatprep.subr.mxu0 0.0
        %747 = vmatpush1.msra.mxu0 %v446
        %748 = vmatprep.subr.mxu0 0.0
        %749 = vmatpush1.msra.mxu0 %v447
        %750 = vmatprep.subr.mxu0 0.0
        %751 = vmatpush1.msra.mxu0 %v448
        %752 = vmatprep.subr.mxu0 0.0
        %753 = vmatpush1.msra.mxu0 %v449
        %754 = vmatprep.subr.mxu0 0.0
        %755 = vmatpush1.msra.mxu0 %v450
        %756 = vmatprep.subr.mxu0 0.0
        %757 = vmatpush1.msra.mxu0 %v451
        %758 = vmatprep.subr.mxu0 0.0
        %759 = vmatpush1.msra.mxu0 %v452
        %760 = vmatprep.subr.mxu0 0.0
        %761 = vmatpush1.msra.mxu0 %v453
        %762 = vmatprep.subr.mxu0 0.0
        %763 = vmatpush1.msra.mxu0 %v454
        %764 = vmatprep.subr.mxu0 0.0
        %765 = vmatpush1.msra.mxu0 %v455
        %766 = vmatprep.subr.mxu0 0.0
        %767 = vmatpush1.msra.mxu0 %v456
        %768 = vmatprep.subr.mxu0 0.0
        %769 = vmatpush1.msra.mxu0 %v457
        %770 = vmatprep.subr.mxu0 0.0
        %771 = vmatpush1.msra.mxu0 %v458
        %772 = vmatprep.subr.mxu0 0.0
        %773 = vmatpush1.msra.mxu0 %v459
        %774 = vmatprep.subr.mxu0 0.0
        %775 = vmatpush1.msra.mxu0 %v460
        %776 = vmatprep.subr.mxu0 0.0
        %777 = vmatpush1.msra.mxu0 %v461
        %778 = vmatprep.subr.mxu0 0.0
        %779 = vmatpush1.msra.mxu0 %v462
        %780 = vmatprep.subr.mxu0 0.0
        %781 = vmatpush1.msra.mxu0 %v463
        %782 = vmatprep.subr.mxu0 0.0
        %783 = vmatpush1.msra.mxu0 %v464
        %784 = vmatprep.subr.mxu0 0.0
        %785 = vmatpush1.msra.mxu0 %v465
        %786 = vmatprep.subr.mxu0 0.0
        %787 = vmatpush1.msra.mxu0 %v466
        %788 = vmatprep.subr.mxu0 0.0
        %789 = vmatpush1.msra.mxu0 %v467
        %790 = vmatprep.subr.mxu0 0.0
        %791 = vmatpush1.msra.mxu0 %v468
        %792 = vmatprep.subr.mxu0 0.0
        %793 = vmatpush1.msra.mxu0 %v469
        %794 = vmatprep.subr.mxu0 0.0
        %795 = vmatpush1.msra.mxu0 %v470
        %796 = vmatprep.subr.mxu0 0.0
        %797 = vmatpush1.msra.mxu0 %v471
        %798 = vmatprep.subr.mxu0 0.0
        %799 = vmatpush1.msra.mxu0 %v472
        %800 = vmatprep.mubr.f32.mxu0 %v222
        %801 = vmatmul.mubr.f32.gmra.mrb[0].mxu0 %v221
        %v802 = vpop.f32.mrb[0].mxu0
        %v803 = vadd.f32 %v643, %v802
        %v804 = vpop.f32.mrb[0].mxu0
        %805 = vmatprep.mubr.f32.mxu0 %v232
        %806 = vmatmul.mubr.f32.gmra.mrb[0].mxu0 %v231
        %v807 = vpop.f32.mrb[0].mxu0
        %v808 = vadd.f32 %v648, %v807
        %v809 = vpop.f32.mrb[0].mxu0
        %810 = vmatprep.mubr.f32.mxu0 %v242
        %811 = vmatmul.mubr.f32.gmra.mrb[0].mxu0 %v241
        %v812 = vpop.f32.mrb[0].mxu0
        %v813 = vadd.f32 %v653, %v812
        %v814 = vpop.f32.mrb[0].mxu0
        %815 = vmatprep.mubr.f32.mxu0 %v252
        %816 = vmatmul.mubr.f32.gmra.mrb[0].mxu0 %v251
        %v817 = vpop.f32.mrb[0].mxu0
        %v818 = vadd.f32 %v658, %v817
        %v819 = vpop.f32.mrb[0].mxu0
        %820 = vmatprep.mubr.f32.mxu0 %v262
        %821 = vmatmul.mubr.f32.gmra.mrb[0].mxu0 %v261
        %v822 = vpop.f32.mrb[0].mxu0
        %v823 = vadd.f32 %v663, %v822
        %v824 = vpop.f32.mrb[0].mxu0
        %825 = vmatprep.mubr.f32.mxu0 %v272
        %826 = vmatmul.mubr.f32.gmra.mrb[0].mxu0 %v271
        %v827 = vpop.f32.mrb[0].mxu0
        %v828 = vadd.f32 %v668, %v827
        %v829 = vpop.f32.mrb[0].mxu0
        %830 = vmatprep.mubr.f32.mxu0 %v282
        %831 = vmatmul.mubr.f32.gmra.mrb[0].mxu0 %v281
        %v832 = vpop.f32.mrb[0].mxu0
        %v833 = vadd.f32 %v673, %v832
        %v834 = vpop.f32.mrb[0].mxu0
        %835 = vmatprep.mubr.f32.mxu0 %v292
        %836 = vmatmul.mubr.f32.gmra.mrb[0].mxu0 %v291
        %v837 = vpop.f32.mrb[0].mxu0
        %v838 = vadd.f32 %v678, %v837
        %v839 = vpop.f32.mrb[0].mxu0
        %840 = vmatprep.mubr.f32.mxu0 %v302
        %841 = vmatmul.mubr.f32.gmra.mrb[0].mxu0 %v301
        %v842 = vpop.f32.mrb[0].mxu0
        %v843 = vadd.f32 %v683, %v842
        %v844 = vpop.f32.mrb[0].mxu0
        %845 = vmatprep.mubr.f32.mxu0 %v312
        %846 = vmatmul.mubr.f32.gmra.mrb[0].mxu0 %v311
        %v847 = vpop.f32.mrb[0].mxu0
        %v848 = vadd.f32 %v688, %v847
        %v849 = vpop.f32.mrb[0].mxu0
        %850 = vmatprep.mubr.f32.mxu0 %v322
        %851 = vmatmul.mubr.f32.gmra.mrb[0].mxu0 %v321
        %v852 = vpop.f32.mrb[0].mxu0
        %v853 = vadd.f32 %v693, %v852
        %v854 = vpop.f32.mrb[0].mxu0
        %855 = vmatprep.mubr.f32.mxu0 %v332
        %856 = vmatmul.mubr.f32.gmra.mrb[0].mxu0 %v331
        %v857 = vpop.f32.mrb[0].mxu0
        %v858 = vadd.f32 %v698, %v857
        %v859 = vpop.f32.mrb[0].mxu0
        %860 = vmatprep.mubr.f32.mxu0 %v342
        %861 = vmatmul.mubr.f32.gmra.mrb[0].mxu0 %v341
        %v862 = vpop.f32.mrb[0].mxu0
        %v863 = vadd.f32 %v703, %v862
        %v864 = vpop.f32.mrb[0].mxu0
        %865 = vmatprep.mubr.f32.mxu0 %v352
        %866 = vmatmul.mubr.f32.gmra.mrb[0].mxu0 %v351
        %v867 = vpop.f32.mrb[0].mxu0
        %v868 = vadd.f32 %v708, %v867
        %v869 = vpop.f32.mrb[0].mxu0
        %870 = vmatprep.mubr.f32.mxu0 %v362
        %871 = vmatmul.mubr.f32.gmra.mrb[0].mxu0 %v361
        %v872 = vpop.f32.mrb[0].mxu0
        %v873 = vadd.f32 %v713, %v872
        %v874 = vpop.f32.mrb[0].mxu0
        %875 = vmatprep.mubr.f32.mxu0 %v372
        %876 = vmatmul.mubr.f32.gmra.mrb[0].mxu0 %v371
        %v877 = vpop.f32.mrb[0].mxu0
        %v878 = vadd.f32 %v718, %v877
        %v879 = vpop.f32.mrb[0].mxu0
        %880 = vmatprep.mubr.f32.mxu0 %v382
        %881 = vmatmul.mubr.f32.gmra.mrb[0].mxu0 %v381
        %v882 = vpop.f32.mrb[0].mxu0
        %v883 = vadd.f32 %v723, %v882
        %v884 = vpop.f32.mrb[0].mxu0
        %885 = vmatprep.mubr.f32.mxu0 %v392
        %886 = vmatmul.mubr.f32.gmra.mrb[0].mxu0 %v391
        %v887 = vpop.f32.mrb[0].mxu0
        %v888 = vadd.f32 %v728, %v887
        %v889 = vpop.f32.mrb[0].mxu0
        %890 = vmatprep.mubr.f32.mxu0 %v402
        %891 = vmatmul.mubr.f32.gmra.mrb[0].mxu0 %v401
        %v892 = vpop.f32.mrb[0].mxu0
        %v893 = vadd.f32 %v733, %v892
        %v894 = vpop.f32.mrb[0].mxu0
        %895 = vdwg.mxu0
        %896 = vmatprep.subr.mxu0 0.0
        %897 = vmatpush1.msra.mxu0 %v473
        %898 = vmatprep.subr.mxu0 0.0
        %899 = vmatpush1.msra.mxu0 %v474
        %900 = vmatprep.subr.mxu0 0.0
        %901 = vmatpush1.msra.mxu0 %v475
        %902 = vmatprep.subr.mxu0 0.0
        %903 = vmatpush1.msra.mxu0 %v476
        %904 = vmatprep.subr.mxu0 0.0
        %905 = vmatpush1.msra.mxu0 %v477
        %906 = vmatprep.subr.mxu0 0.0
        %907 = vmatpush1.msra.mxu0 %v478
        %908 = vmatprep.subr.mxu0 0.0
        %909 = vmatpush1.msra.mxu0 %v479
        %910 = vmatprep.subr.mxu0 0.0
        %911 = vmatpush1.msra.mxu0 %v480
        %912 = vmatprep.subr.mxu0 0.0
        %913 = vmatpush1.msra.mxu0 %v481
        %914 = vmatprep.subr.mxu0 0.0
        %915 = vmatpush1.msra.mxu0 %v482
        %916 = vmatprep.subr.mxu0 0.0
        %917 = vmatpush1.msra.mxu0 %v483
        %918 = vmatprep.subr.mxu0 0.0
        %919 = vmatpush1.msra.mxu0 %v484
        %920 = vmatprep.subr.mxu0 0.0
        %921 = vmatpush1.msra.mxu0 %v485
        %922 = vmatprep.subr.mxu0 0.0
        %923 = vmatpush1.msra.mxu0 %v486
        %924 = vmatprep.subr.mxu0 0.0
        %925 = vmatpush1.msra.mxu0 %v487
        %926 = vmatprep.subr.mxu0 0.0
        %927 = vmatpush1.msra.mxu0 %v488
        %928 = vmatprep.subr.mxu0 0.0
        %929 = vmatpush1.msra.mxu0 %v489
        %930 = vmatprep.subr.mxu0 0.0
        %931 = vmatpush1.msra.mxu0 %v490
        %932 = vmatprep.subr.mxu0 0.0
        %933 = vmatpush1.msra.mxu0 %v491
        %934 = vmatprep.subr.mxu0 0.0
        %935 = vmatpush1.msra.mxu0 %v492
        %936 = vmatprep.subr.mxu0 0.0
        %937 = vmatpush1.msra.mxu0 %v493
        %938 = vmatprep.subr.mxu0 0.0
        %939 = vmatpush1.msra.mxu0 %v494
        %940 = vmatprep.subr.mxu0 0.0
        %941 = vmatpush1.msra.mxu0 %v495
        %942 = vmatprep.subr.mxu0 0.0
        %943 = vmatpush1.msra.mxu0 %v496
        %944 = vmatprep.subr.mxu0 0.0
        %945 = vmatpush1.msra.mxu0 %v497
        %946 = vmatprep.subr.mxu0 0.0
        %947 = vmatpush1.msra.mxu0 %v498
        %948 = vmatprep.subr.mxu0 0.0
        %949 = vmatpush1.msra.mxu0 %v499
        %950 = vmatprep.subr.mxu0 0.0
        %951 = vmatpush1.msra.mxu0 %v500
        %952 = vmatprep.subr.mxu0 0.0
        %953 = vmatpush1.msra.mxu0 %v501
        %954 = vmatprep.subr.mxu0 0.0
        %955 = vmatpush1.msra.mxu0 %v502
        %956 = vmatprep.subr.mxu0 0.0
        %957 = vmatpush1.msra.mxu0 %v503
        %958 = vmatprep.subr.mxu0 0.0
        %959 = vmatpush1.msra.mxu0 %v504
        %960 = vmatprep.mubr.f32.mxu0 %v224
        %961 = vmatmul.mubr.f32.gmra.mrb[0].mxu0 %v223
        %v962 = vpop.f32.mrb[0].mxu0
        %v963 = vadd.f32 %v803, %v962
        %v964 = vpop.f32.mrb[0].mxu0
        %965 = vmatprep.mubr.f32.mxu0 %v234
        %966 = vmatmul.mubr.f32.gmra.mrb[0].mxu0 %v233
        %v967 = vpop.f32.mrb[0].mxu0
        %v968 = vadd.f32 %v808, %v967
        %v969 = vpop.f32.mrb[0].mxu0
        %970 = vmatprep.mubr.f32.mxu0 %v244
        %971 = vmatmul.mubr.f32.gmra.mrb[0].mxu0 %v243
        %v972 = vpop.f32.mrb[0].mxu0
        %v973 = vadd.f32 %v813, %v972
        %v974 = vpop.f32.mrb[0].mxu0
        %975 = vmatprep.mubr.f32.mxu0 %v254
        %976 = vmatmul.mubr.f32.gmra.mrb[0].mxu0 %v253
        %v977 = vpop.f32.mrb[0].mxu0
        %v978 = vadd.f32 %v818, %v977
        %v979 = vpop.f32.mrb[0].mxu0
        %980 = vmatprep.mubr.f32.mxu0 %v264
        %981 = vmatmul.mubr.f32.gmra.mrb[0].mxu0 %v263
        %v982 = vpop.f32.mrb[0].mxu0
        %v983 = vadd.f32 %v823, %v982
        %v984 = vpop.f32.mrb[0].mxu0
        %985 = vmatprep.mubr.f32.mxu0 %v274
        %986 = vmatmul.mubr.f32.gmra.mrb[0].mxu0 %v273
        %v987 = vpop.f32.mrb[0].mxu0
        %v988 = vadd.f32 %v828, %v987
        %v989 = vpop.f32.mrb[0].mxu0
        %990 = vmatprep.mubr.f32.mxu0 %v284
        %991 = vmatmul.mubr.f32.gmra.mrb[0].mxu0 %v283
        %v992 = vpop.f32.mrb[0].mxu0
        %v993 = vadd.f32 %v833, %v992
        %v994 = vpop.f32.mrb[0].mxu0
        %995 = vmatprep.mubr.f32.mxu0 %v294
        %996 = vmatmul.mubr.f32.gmra.mrb[0].mxu0 %v293
        %v997 = vpop.f32.mrb[0].mxu0
        %v998 = vadd.f32 %v838, %v997
        %v999 = vpop.f32.mrb[0].mxu0
        %1000 = vmatprep.mubr.f32.mxu0 %v304
        %1001 = vmatmul.mubr.f32.gmra.mrb[0].mxu0 %v303
        %v1002 = vpop.f32.mrb[0].mxu0
        %v1003 = vadd.f32 %v843, %v1002
        %v1004 = vpop.f32.mrb[0].mxu0
        %1005 = vmatprep.mubr.f32.mxu0 %v314
        %1006 = vmatmul.mubr.f32.gmra.mrb[0].mxu0 %v313
        %v1007 = vpop.f32.mrb[0].mxu0
        %v1008 = vadd.f32 %v848, %v1007
        %v1009 = vpop.f32.mrb[0].mxu0
        %1010 = vmatprep.mubr.f32.mxu0 %v324
        %1011 = vmatmul.mubr.f32.gmra.mrb[0].mxu0 %v323
        %v1012 = vpop.f32.mrb[0].mxu0
        %v1013 = vadd.f32 %v853, %v1012
        %v1014 = vpop.f32.mrb[0].mxu0
        %1015 = vmatprep.mubr.f32.mxu0 %v334
        %1016 = vmatmul.mubr.f32.gmra.mrb[0].mxu0 %v333
        %v1017 = vpop.f32.mrb[0].mxu0
        %v1018 = vadd.f32 %v858, %v1017
        %v1019 = vpop.f32.mrb[0].mxu0
        %1020 = vmatprep.mubr.f32.mxu0 %v344
        %1021 = vmatmul.mubr.f32.gmra.mrb[0].mxu0 %v343
        %v1022 = vpop.f32.mrb[0].mxu0
        %v1023 = vadd.f32 %v863, %v1022
        %v1024 = vpop.f32.mrb[0].mxu0
        %1025 = vmatprep.mubr.f32.mxu0 %v354
        %1026 = vmatmul.mubr.f32.gmra.mrb[0].mxu0 %v353
        %v1027 = vpop.f32.mrb[0].mxu0
        %v1028 = vadd.f32 %v868, %v1027
        %v1029 = vpop.f32.mrb[0].mxu0
        %1030 = vmatprep.mubr.f32.mxu0 %v364
        %1031 = vmatmul.mubr.f32.gmra.mrb[0].mxu0 %v363
        %v1032 = vpop.f32.mrb[0].mxu0
        %v1033 = vadd.f32 %v873, %v1032
        %v1034 = vpop.f32.mrb[0].mxu0
        %1035 = vmatprep.mubr.f32.mxu0 %v374
        %1036 = vmatmul.mubr.f32.gmra.mrb[0].mxu0 %v373
        %v1037 = vpop.f32.mrb[0].mxu0
        %v1038 = vadd.f32 %v878, %v1037
        %v1039 = vpop.f32.mrb[0].mxu0
        %1040 = vmatprep.mubr.f32.mxu0 %v384
        %1041 = vmatmul.mubr.f32.gmra.mrb[0].mxu0 %v383
        %v1042 = vpop.f32.mrb[0].mxu0
        %v1043 = vadd.f32 %v883, %v1042
        %v1044 = vpop.f32.mrb[0].mxu0
        %1045 = vmatprep.mubr.f32.mxu0 %v394
        %1046 = vmatmul.mubr.f32.gmra.mrb[0].mxu0 %v393
        %v1047 = vpop.f32.mrb[0].mxu0
        %v1048 = vadd.f32 %v888, %v1047
        %v1049 = vpop.f32.mrb[0].mxu0
        %1050 = vmatprep.mubr.f32.mxu0 %v404
        %1051 = vmatmul.mubr.f32.gmra.mrb[0].mxu0 %v403
        %v1052 = vpop.f32.mrb[0].mxu0
        %v1053 = vadd.f32 %v893, %v1052
        %v1054 = vpop.f32.mrb[0].mxu0
        %1055 = vdwg.mxu0
        %1056 = vmatprep.subr.mxu0 0.0
        %1057 = vmatpush1.msra.mxu0 %v505
        %1058 = vmatprep.subr.mxu0 0.0
        %1059 = vmatpush1.msra.mxu0 %v506
        %1060 = vmatprep.subr.mxu0 0.0
        %1061 = vmatpush1.msra.mxu0 %v507
        %1062 = vmatprep.subr.mxu0 0.0
        %1063 = vmatpush1.msra.mxu0 %v508
        %1064 = vmatprep.subr.mxu0 0.0
        %1065 = vmatpush1.msra.mxu0 %v509
        %1066 = vmatprep.subr.mxu0 0.0
        %1067 = vmatpush1.msra.mxu0 %v510
        %1068 = vmatprep.subr.mxu0 0.0
        %1069 = vmatpush1.msra.mxu0 %v511
        %1070 = vmatprep.subr.mxu0 0.0
        %1071 = vmatpush1.msra.mxu0 %v512
        %1072 = vmatprep.subr.mxu0 0.0
        %1073 = vmatpush1.msra.mxu0 %v513
        %1074 = vmatprep.subr.mxu0 0.0
        %1075 = vmatpush1.msra.mxu0 %v514
        %1076 = vmatprep.subr.mxu0 0.0
        %1077 = vmatpush1.msra.mxu0 %v515
        %1078 = vmatprep.subr.mxu0 0.0
        %1079 = vmatpush1.msra.mxu0 %v516
        %1080 = vmatprep.subr.mxu0 0.0
        %1081 = vmatpush1.msra.mxu0 %v517
        %1082 = vmatprep.subr.mxu0 0.0
        %1083 = vmatpush1.msra.mxu0 %v518
        %1084 = vmatprep.subr.mxu0 0.0
        %1085 = vmatpush1.msra.mxu0 %v519
        %1086 = vmatprep.subr.mxu0 0.0
        %1087 = vmatpush1.msra.mxu0 %v520
        %1088 = vmatprep.subr.mxu0 0.0
        %1089 = vmatpush1.msra.mxu0 %v521
        %1090 = vmatprep.subr.mxu0 0.0
        %1091 = vmatpush1.msra.mxu0 %v522
        %1092 = vmatprep.subr.mxu0 0.0
        %1093 = vmatpush1.msra.mxu0 %v523
        %1094 = vmatprep.subr.mxu0 0.0
        %1095 = vmatpush1.msra.mxu0 %v524
        %1096 = vmatprep.subr.mxu0 0.0
        %1097 = vmatpush1.msra.mxu0 %v525
        %1098 = vmatprep.subr.mxu0 0.0
        %1099 = vmatpush1.msra.mxu0 %v526
        %1100 = vmatprep.subr.mxu0 0.0
        %1101 = vmatpush1.msra.mxu0 %v527
        %1102 = vmatprep.subr.mxu0 0.0
        %1103 = vmatpush1.msra.mxu0 %v528
        %1104 = vmatprep.subr.mxu0 0.0
        %1105 = vmatpush1.msra.mxu0 %v529
        %1106 = vmatprep.subr.mxu0 0.0
        %1107 = vmatpush1.msra.mxu0 %v530
        %1108 = vmatprep.subr.mxu0 0.0
        %1109 = vmatpush1.msra.mxu0 %v531
        %1110 = vmatprep.subr.mxu0 0.0
        %1111 = vmatpush1.msra.mxu0 %v532
        %1112 = vmatprep.subr.mxu0 0.0
        %1113 = vmatpush1.msra.mxu0 %v533
        %1114 = vmatprep.subr.mxu0 0.0
        %1115 = vmatpush1.msra.mxu0 %v534
        %1116 = vmatprep.subr.mxu0 0.0
        %1117 = vmatpush1.msra.mxu0 %v535
        %1118 = vmatprep.subr.mxu0 0.0
        %1119 = vmatpush1.msra.mxu0 %v536
        %1120 = vmatprep.mubr.f32.mxu0 %v226
        %1121 = vmatmul.mubr.f32.gmra.mrb[0].mxu0 %v225
        %v1122 = vpop.f32.mrb[0].mxu0
        %v1123 = vadd.f32 %v963, %v1122
        %v1124 = vpop.f32.mrb[0].mxu0
        %1125 = vmatprep.mubr.f32.mxu0 %v236
        %1126 = vmatmul.mubr.f32.gmra.mrb[0].mxu0 %v235
        %v1127 = vpop.f32.mrb[0].mxu0
        %v1128 = vadd.f32 %v968, %v1127
        %v1129 = vpop.f32.mrb[0].mxu0
        %1130 = vmatprep.mubr.f32.mxu0 %v246
        %1131 = vmatmul.mubr.f32.gmra.mrb[0].mxu0 %v245
        %v1132 = vpop.f32.mrb[0].mxu0
        %v1133 = vadd.f32 %v973, %v1132
        %v1134 = vpop.f32.mrb[0].mxu0
        %1135 = vmatprep.mubr.f32.mxu0 %v256
        %1136 = vmatmul.mubr.f32.gmra.mrb[0].mxu0 %v255
        %v1137 = vpop.f32.mrb[0].mxu0
        %v1138 = vadd.f32 %v978, %v1137
        %v1139 = vpop.f32.mrb[0].mxu0
        %1140 = vmatprep.mubr.f32.mxu0 %v266
        %1141 = vmatmul.mubr.f32.gmra.mrb[0].mxu0 %v265
        %v1142 = vpop.f32.mrb[0].mxu0
        %v1143 = vadd.f32 %v983, %v1142
        %v1144 = vpop.f32.mrb[0].mxu0
        %1145 = vmatprep.mubr.f32.mxu0 %v276
        %1146 = vmatmul.mubr.f32.gmra.mrb[0].mxu0 %v275
        %v1147 = vpop.f32.mrb[0].mxu0
        %v1148 = vadd.f32 %v988, %v1147
        %v1149 = vpop.f32.mrb[0].mxu0
        %1150 = vmatprep.mubr.f32.mxu0 %v286
        %1151 = vmatmul.mubr.f32.gmra.mrb[0].mxu0 %v285
        %v1152 = vpop.f32.mrb[0].mxu0
        %v1153 = vadd.f32 %v993, %v1152
        %v1154 = vpop.f32.mrb[0].mxu0
        %1155 = vmatprep.mubr.f32.mxu0 %v296
        %1156 = vmatmul.mubr.f32.gmra.mrb[0].mxu0 %v295
        %v1157 = vpop.f32.mrb[0].mxu0
        %v1158 = vadd.f32 %v998, %v1157
        %v1159 = vpop.f32.mrb[0].mxu0
        %1160 = vmatprep.mubr.f32.mxu0 %v306
        %1161 = vmatmul.mubr.f32.gmra.mrb[0].mxu0 %v305
        %v1162 = vpop.f32.mrb[0].mxu0
        %v1163 = vadd.f32 %v1003, %v1162
        %v1164 = vpop.f32.mrb[0].mxu0
        %1165 = vmatprep.mubr.f32.mxu0 %v316
        %1166 = vmatmul.mubr.f32.gmra.mrb[0].mxu0 %v315
        %v1167 = vpop.f32.mrb[0].mxu0
        %v1168 = vadd.f32 %v1008, %v1167
        %v1169 = vpop.f32.mrb[0].mxu0
        %1170 = vmatprep.mubr.f32.mxu0 %v326
        %1171 = vmatmul.mubr.f32.gmra.mrb[0].mxu0 %v325
        %v1172 = vpop.f32.mrb[0].mxu0
        %v1173 = vadd.f32 %v1013, %v1172
        %v1174 = vpop.f32.mrb[0].mxu0
        %1175 = vmatprep.mubr.f32.mxu0 %v336
        %1176 = vmatmul.mubr.f32.gmra.mrb[0].mxu0 %v335
        %v1177 = vpop.f32.mrb[0].mxu0
        %v1178 = vadd.f32 %v1018, %v1177
        %v1179 = vpop.f32.mrb[0].mxu0
        %1180 = vmatprep.mubr.f32.mxu0 %v346
        %1181 = vmatmul.mubr.f32.gmra.mrb[0].mxu0 %v345
        %v1182 = vpop.f32.mrb[0].mxu0
        %v1183 = vadd.f32 %v1023, %v1182
        %v1184 = vpop.f32.mrb[0].mxu0
        %1185 = vmatprep.mubr.f32.mxu0 %v356
        %1186 = vmatmul.mubr.f32.gmra.mrb[0].mxu0 %v355
        %v1187 = vpop.f32.mrb[0].mxu0
        %v1188 = vadd.f32 %v1028, %v1187
        %v1189 = vpop.f32.mrb[0].mxu0
        %1190 = vmatprep.mubr.f32.mxu0 %v366
        %1191 = vmatmul.mubr.f32.gmra.mrb[0].mxu0 %v365
        %v1192 = vpop.f32.mrb[0].mxu0
        %v1193 = vadd.f32 %v1033, %v1192
        %v1194 = vpop.f32.mrb[0].mxu0
        %1195 = vmatprep.mubr.f32.mxu0 %v376
        %1196 = vmatmul.mubr.f32.gmra.mrb[0].mxu0 %v375
        %v1197 = vpop.f32.mrb[0].mxu0
        %v1198 = vadd.f32 %v1038, %v1197
        %v1199 = vpop.f32.mrb[0].mxu0
        %1200 = vmatprep.mubr.f32.mxu0 %v386
        %1201 = vmatmul.mubr.f32.gmra.mrb[0].mxu0 %v385
        %v1202 = vpop.f32.mrb[0].mxu0
        %v1203 = vadd.f32 %v1043, %v1202
        %v1204 = vpop.f32.mrb[0].mxu0
        %1205 = vmatprep.mubr.f32.mxu0 %v396
        %1206 = vmatmul.mubr.f32.gmra.mrb[0].mxu0 %v395
        %v1207 = vpop.f32.mrb[0].mxu0
        %v1208 = vadd.f32 %v1048, %v1207
        %v1209 = vpop.f32.mrb[0].mxu0
        %1210 = vmatprep.mubr.f32.mxu0 %v406
        %1211 = vmatmul.mubr.f32.gmra.mrb[0].mxu0 %v405
        %v1212 = vpop.f32.mrb[0].mxu0
        %v1213 = vadd.f32 %v1053, %v1212
        %v1214 = vpop.f32.mrb[0].mxu0
        %1215 = vdwg.mxu0
        %1216 = vmatprep.subr.mxu0 0.0
        %1217 = vmatpush1.msra.mxu0 %v537
        %1218 = vmatprep.subr.mxu0 0.0
        %1219 = vmatpush1.msra.mxu0 %v538
        %1220 = vmatprep.subr.mxu0 0.0
        %1221 = vmatpush1.msra.mxu0 %v539
        %1222 = vmatprep.subr.mxu0 0.0
        %1223 = vmatpush1.msra.mxu0 %v540
        %1224 = vmatprep.subr.mxu0 0.0
        %1225 = vmatpush1.msra.mxu0 %v541
        %1226 = vmatprep.subr.mxu0 0.0
        %1227 = vmatpush1.msra.mxu0 %v542
        %1228 = vmatprep.subr.mxu0 0.0
        %1229 = vmatpush1.msra.mxu0 %v543
        %1230 = vmatprep.subr.mxu0 0.0
        %1231 = vmatpush1.msra.mxu0 %v544
        %1232 = vmatprep.subr.mxu0 0.0
        %1233 = vmatpush1.msra.mxu0 %v545
        %1234 = vmatprep.subr.mxu0 0.0
        %1235 = vmatpush1.msra.mxu0 %v546
        %1236 = vmatprep.subr.mxu0 0.0
        %1237 = vmatpush1.msra.mxu0 %v547
        %1238 = vmatprep.subr.mxu0 0.0
        %1239 = vmatpush1.msra.mxu0 %v548
        %1240 = vmatprep.subr.mxu0 0.0
        %1241 = vmatpush1.msra.mxu0 %v549
        %1242 = vmatprep.subr.mxu0 0.0
        %1243 = vmatpush1.msra.mxu0 %v550
        %1244 = vmatprep.subr.mxu0 0.0
        %1245 = vmatpush1.msra.mxu0 %v551
        %1246 = vmatprep.subr.mxu0 0.0
        %1247 = vmatpush1.msra.mxu0 %v552
        %1248 = vmatprep.subr.mxu0 0.0
        %1249 = vmatpush1.msra.mxu0 %v553
        %1250 = vmatprep.subr.mxu0 0.0
        %1251 = vmatpush1.msra.mxu0 %v554
        %1252 = vmatprep.subr.mxu0 0.0
        %1253 = vmatpush1.msra.mxu0 %v555
        %1254 = vmatprep.subr.mxu0 0.0
        %1255 = vmatpush1.msra.mxu0 %v556
        %1256 = vmatprep.subr.mxu0 0.0
        %1257 = vmatpush1.msra.mxu0 %v557
        %1258 = vmatprep.subr.mxu0 0.0
        %1259 = vmatpush1.msra.mxu0 %v558
        %1260 = vmatprep.subr.mxu0 0.0
        %1261 = vmatpush1.msra.mxu0 %v559
        %1262 = vmatprep.subr.mxu0 0.0
        %1263 = vmatpush1.msra.mxu0 %v560
        %1264 = vmatprep.subr.mxu0 0.0
        %1265 = vmatpush1.msra.mxu0 %v561
        %1266 = vmatprep.subr.mxu0 0.0
        %1267 = vmatpush1.msra.mxu0 %v562
        %1268 = vmatprep.subr.mxu0 0.0
        %1269 = vmatpush1.msra.mxu0 %v563
        %1270 = vmatprep.subr.mxu0 0.0
        %1271 = vmatpush1.msra.mxu0 %v564
        %1272 = vmatprep.subr.mxu0 0.0
        %1273 = vmatpush1.msra.mxu0 %v565
        %1274 = vmatprep.subr.mxu0 0.0
        %1275 = vmatpush1.msra.mxu0 %v566
        %1276 = vmatprep.subr.mxu0 0.0
        %1277 = vmatpush1.msra.mxu0 %v567
        %1278 = vmatprep.subr.mxu0 0.0
        %1279 = vmatpush1.msra.mxu0 %v568
        %1280 = vmatprep.mubr.f32.mxu0 %v228
        %1281 = vmatmul.mubr.f32.gmra.mrb[0].mxu0 %v227
        %v1282 = vpop.f32.mrb[0].mxu0
        %v1283 = vadd.f32 %v1123, %v1282
        %v1284 = vpop.f32.mrb[0].mxu0
        %1285 = vmatprep.mubr.f32.mxu0 %v238
        %1286 = vmatmul.mubr.f32.gmra.mrb[0].mxu0 %v237
        %v1287 = vpop.f32.mrb[0].mxu0
        %v1288 = vadd.f32 %v1128, %v1287
        %v1289 = vpop.f32.mrb[0].mxu0
        %1290 = vmatprep.mubr.f32.mxu0 %v248
        %1291 = vmatmul.mubr.f32.gmra.mrb[0].mxu0 %v247
        %v1292 = vpop.f32.mrb[0].mxu0
        %v1293 = vadd.f32 %v1133, %v1292
        %v1294 = vpop.f32.mrb[0].mxu0
        %1295 = vmatprep.mubr.f32.mxu0 %v258
        %1296 = vmatmul.mubr.f32.gmra.mrb[0].mxu0 %v257
        %v1297 = vpop.f32.mrb[0].mxu0
        %v1298 = vadd.f32 %v1138, %v1297
        %v1299 = vpop.f32.mrb[0].mxu0
        %1300 = vmatprep.mubr.f32.mxu0 %v268
        %1301 = vmatmul.mubr.f32.gmra.mrb[0].mxu0 %v267
        %v1302 = vpop.f32.mrb[0].mxu0
        %v1303 = vadd.f32 %v1143, %v1302
        %v1304 = vpop.f32.mrb[0].mxu0
        %1305 = vmatprep.mubr.f32.mxu0 %v278
        %1306 = vmatmul.mubr.f32.gmra.mrb[0].mxu0 %v277
        %v1307 = vpop.f32.mrb[0].mxu0
        %v1308 = vadd.f32 %v1148, %v1307
        %v1309 = vpop.f32.mrb[0].mxu0
        %1310 = vmatprep.mubr.f32.mxu0 %v288
        %1311 = vmatmul.mubr.f32.gmra.mrb[0].mxu0 %v287
        %v1312 = vpop.f32.mrb[0].mxu0
        %v1313 = vadd.f32 %v1153, %v1312
        %v1314 = vpop.f32.mrb[0].mxu0
        %1315 = vmatprep.mubr.f32.mxu0 %v298
        %1316 = vmatmul.mubr.f32.gmra.mrb[0].mxu0 %v297
        %v1317 = vpop.f32.mrb[0].mxu0
        %v1318 = vadd.f32 %v1158, %v1317
        %v1319 = vpop.f32.mrb[0].mxu0
        %1320 = vmatprep.mubr.f32.mxu0 %v308
        %1321 = vmatmul.mubr.f32.gmra.mrb[0].mxu0 %v307
        %v1322 = vpop.f32.mrb[0].mxu0
        %v1323 = vadd.f32 %v1163, %v1322
        %v1324 = vpop.f32.mrb[0].mxu0
        %1325 = vmatprep.mubr.f32.mxu0 %v318
        %1326 = vmatmul.mubr.f32.gmra.mrb[0].mxu0 %v317
        %v1327 = vpop.f32.mrb[0].mxu0
        %v1328 = vadd.f32 %v1168, %v1327
        %v1329 = vpop.f32.mrb[0].mxu0
        %1330 = vmatprep.mubr.f32.mxu0 %v328
        %1331 = vmatmul.mubr.f32.gmra.mrb[0].mxu0 %v327
        %v1332 = vpop.f32.mrb[0].mxu0
        %v1333 = vadd.f32 %v1173, %v1332
        %v1334 = vpop.f32.mrb[0].mxu0
        %1335 = vmatprep.mubr.f32.mxu0 %v338
        %1336 = vmatmul.mubr.f32.gmra.mrb[0].mxu0 %v337
        %v1337 = vpop.f32.mrb[0].mxu0
        %v1338 = vadd.f32 %v1178, %v1337
        %v1339 = vpop.f32.mrb[0].mxu0
        %1340 = vmatprep.mubr.f32.mxu0 %v348
        %1341 = vmatmul.mubr.f32.gmra.mrb[0].mxu0 %v347
        %v1342 = vpop.f32.mrb[0].mxu0
        %v1343 = vadd.f32 %v1183, %v1342
        %v1344 = vpop.f32.mrb[0].mxu0
        %1345 = vmatprep.mubr.f32.mxu0 %v358
        %1346 = vmatmul.mubr.f32.gmra.mrb[0].mxu0 %v357
        %v1347 = vpop.f32.mrb[0].mxu0
        %v1348 = vadd.f32 %v1188, %v1347
        %v1349 = vpop.f32.mrb[0].mxu0
        %1350 = vmatprep.mubr.f32.mxu0 %v368
        %1351 = vmatmul.mubr.f32.gmra.mrb[0].mxu0 %v367
        %v1352 = vpop.f32.mrb[0].mxu0
        %v1353 = vadd.f32 %v1193, %v1352
        %v1354 = vpop.f32.mrb[0].mxu0
        %1355 = vmatprep.mubr.f32.mxu0 %v378
        %1356 = vmatmul.mubr.f32.gmra.mrb[0].mxu0 %v377
        %v1357 = vpop.f32.mrb[0].mxu0
        %v1358 = vadd.f32 %v1198, %v1357
        %v1359 = vpop.f32.mrb[0].mxu0
        %1360 = vmatprep.mubr.f32.mxu0 %v388
        %1361 = vmatmul.mubr.f32.gmra.mrb[0].mxu0 %v387
        %v1362 = vpop.f32.mrb[0].mxu0
        %v1363 = vadd.f32 %v1203, %v1362
        %v1364 = vpop.f32.mrb[0].mxu0
        %1365 = vmatprep.mubr.f32.mxu0 %v398
        %1366 = vmatmul.mubr.f32.gmra.mrb[0].mxu0 %v397
        %v1367 = vpop.f32.mrb[0].mxu0
        %v1368 = vadd.f32 %v1208, %v1367
        %v1369 = vpop.f32.mrb[0].mxu0
        %1370 = vmatprep.mubr.f32.mxu0 %v408
        %1371 = vmatmul.mubr.f32.gmra.mrb[0].mxu0 %v407
        %v1372 = vpop.f32.mrb[0].mxu0
        %v1373 = vadd.f32 %v1213, %v1372
        %v1374 = vpop.f32.mrb[0].mxu0
        %1375 = vdwg.mxu0
        %1376 = vst [vmem:[%s216] sm:$0xff] %v1283
        %1377 = vst [vmem:[%s216 + $0x8] sm:$0xff] %v1288
        %1378 = vst [vmem:[%s216 + $0x10] sm:$0xff] %v1293
        %1379 = vst [vmem:[%s216 + $0x18] sm:$0xff] %v1298
        %1380 = vst [vmem:[%s216 + $0x20] sm:$0xff] %v1303
        %1381 = vst [vmem:[%s216 + $0x28] sm:$0xff] %v1308
        %1382 = vst [vmem:[%s216 + $0x30] sm:$0xff] %v1313
        %1383 = vst [vmem:[%s216 + $0x38] sm:$0xff] %v1318
        %1384 = vst [vmem:[%s216 + $0x40] sm:$0xff] %v1323
        %1385 = vst [vmem:[%s216 + $0x48] sm:$0xff] %v1328
        %1386 = vst [vmem:[%s216 + $0x50] sm:$0xff] %v1333
        %1387 = vst [vmem:[%s216 + $0x58] sm:$0xff] %v1338
        %1388 = vst [vmem:[%s216 + $0x60] sm:$0xff] %v1343
        %1389 = vst [vmem:[%s216 + $0x68] sm:$0xff] %v1348
        %1390 = vst [vmem:[%s216 + $0x70] sm:$0xff] %v1353
        %1391 = vst [vmem:[%s216 + $0x78] sm:$0xff] %v1358
        %1392 = vst [vmem:[%s216 + $0x80] sm:$0xff] %v1363
        %1393 = vst [vmem:[%s216 + $0x88] sm:$0xff] %v1368
        %1394 = vst [vmem:[%s216 + $0x90] sm:$0xff] %v1373
        %s1395 = sand.u32 %s97, 1
        %s1396 = scalar_lea.sflag [#allocation4], %s1395
        %s1397 = sand.u32 %s97, 1
        %s1398 = smul.addr %s1397, 152
        %s1399 = scalar_lea.vmem [#allocation8], %s1398
        // Predicated region
        $region45: #{tpu_custom_call.1} parent=31 // pred_check
          %p1400 = pneg %p107
        $region46: #{tpu_custom_call.1} parent=31 // pred_check_branch
          %1402 = sbr.rel (%p1400) target = $region48
        $region47: #{tpu_custom_call.1} parent=31 // pred_region
          %s1403 = smul.u32 19, %s21
          %s1405 = ssub.s32 2432, 2432
          %1406 = vsyncadd %s1396, %s1405
          %s1407 = smul.addr %s1403, 128
          %s1408 = scalar_lea.hbm %s3, %s1407
          %s1409 = sshll.u32 %s1399, 4
          %s1410 = int_to_ptr.vmem [resolvable:$true] %s1409
          %1415 = dma.vmem_to_hbm [thread:$0]  %s1410, 2432, %s1408, %s1396, 128, 128, 8
        $region48: #{tpu_custom_call.1} parent=31 // pred_fallthru
          _
      $region32: #{tpu_custom_call.1} parent=5 // pred_fallthru
        _
      %p1416 = scmp.le.s32.totalorder 2, %s16
      // Predicated region
      $region49: #{tpu_custom_call.1} parent=5 // pred_check
        %p1417 = pneg %p1416
      $region50: #{tpu_custom_call.1} parent=5 // pred_check_branch
        %1419 = sbr.rel (%p1417) target = $region52
      $region51: #{tpu_custom_call.1} parent=5 // pred_region
        %s1420 = ssub.s32 %s16, 2
        // Predicated region
        $region53: #{tpu_custom_call.1} parent=51 // pred_check
          %p1421 = pneg %p113
        $region54: #{tpu_custom_call.1} parent=51 // pred_check_branch
          %1423 = sbr.rel (%p1421) target = $region56
        $region55: #{tpu_custom_call.1} parent=51 // pred_region
          %s1424 = sand.u32 %s98, 1
          %s1425 = scalar_lea.sflag [#allocation4], %s1424
          %s1426 = sand.u32 %s98, 1
          %s1427 = smul.addr %s1426, 152
          %s1428 = scalar_lea.vmem [#allocation8], %s1427
          %1429 = dma.done %s1425, 2432
        $region56: #{tpu_custom_call.1} parent=51 // pred_fallthru
          _
      $region52: #{tpu_custom_call.1} parent=5 // pred_fallthru
        _
    $region6: #{tpu_custom_call.1} parent=1 // loop_footer
      %s20 = sadd.s32 1, %s16
    $region7: #{tpu_custom_call.1} parent=1 // loop_footer_branch
      %15 = sbr.rel target = $region3
    $region8: #{tpu_custom_call.1} parent=1 // loop_exit
      _
    %1430 = vsyncpa [#allocation3], 1
    %s1431 = scalar_lea.sflag [#allocation3], 1
    %1432 = vsyncpa %s1431, 1
    %1433 = vsyncpa [#allocation6], 1
    %1434 = vsyncpa [#allocation4], 1
    %s1435 = scalar_lea.sflag [#allocation4], 1
    %1436 = vsyncpa %s1435, 1

</llo_original>
